<compile_context>
chip_gen: v6e
topology: v6e:2x2x1
jax: 0.10.0
libtpu: 0.0.40
codegen_flags: <defaults>
</compile_context>

<pallas_src>
import jax
import jax.numpy as jnp
from jax import lax
from jax.experimental import pallas as pl
from jax.experimental.pallas import tpu as pltpu


# ----------------------------- Pallas kernel -------------------------------
def _make_critic_chunk_kernel(hidden_dim: int, time_chunk: int):
    H = hidden_dim
    Tc = time_chunk

    def kernel(x_ref,      # (Tc, Bt, D)  time-chunk of the input sequence
               h0_ref,     # (Bt, H)      initial hidden (resident)
               w1_ref,     # (D, H)       fc1 weight (resident)
               b1_ref,     # (1, H)
               wgx_ref,    # (H, 4H)      fused GRU input weight  [i_r|i_z|i_n|0]
               wgh_ref,    # (H, 4H)      fused GRU hidden weight [h_r|h_z|0|h_n]
               bg_ref,     # (1, 4H)
               w2_ref,     # (1, H)       fc2 weight row (resident)
               b2_ref,     # (1, 1)
               val_ref,    # (Tc, Bt)     per-chunk values (single writeback)
               hout_ref,   # (Bt, H)      carried / final hidden (revisited block)
               h_stash):   # VMEM (Tc, Bt, H) per-step hidden stash
        c = pl.program_id(1)     # time-chunk index (sequential axis)

        @pl.when(c == 0)
        def _():
            hout_ref[...] = h0_ref[...]

        # Hoist resident weights out of the recurrent loop.
        w1 = w1_ref[...]
        b1 = b1_ref[...]
        wgx = wgx_ref[...]
        wgh = wgh_ref[...]
        bg = bg_ref[...]

        def step(t, h):
            x = x_ref[t]                                            # (Bt, D)
            # fc1 + relu
            x1 = jnp.maximum(
                jnp.dot(x, w1, preferred_element_type=jnp.float32) + b1, 0.0)
            # Fused GRU gates: two accumulating MXU dots (no concatenate).
            #   g[:, 0:H]   = i_r + h_r
            #   g[:, H:2H]  = i_z + h_z
            #   g[:, 2H:3H] = i_n
            #   g[:, 3H:4H] = h_n
            g = (jnp.dot(x1, wgx, preferred_element_type=jnp.float32)
                 + jnp.dot(h, wgh, preferred_element_type=jnp.float32)
                 + bg)                                              # (Bt, 4H)
            r = jax.nn.sigmoid(g[:, 0:H])
            z = jax.nn.sigmoid(g[:, H:2 * H])
            n = jnp.tanh(g[:, 2 * H:3 * H] + r * g[:, 3 * H:4 * H])
            h_new = (1.0 - z) * n + z * h                           # (Bt, H)
            h_stash[t] = h_new
            return h_new

        h_final = lax.fori_loop(0, Tc, step, hout_ref[...], unroll=True)

        # Value head hoisted out of the recurrent loop: one VPU multiply +
        # lane reduction for the whole chunk, one lane-contiguous store.
        h_all = h_stash[...]                                        # (Tc, Bt, H)
        vals = jnp.sum(h_all * w2_ref[...], axis=-1) + b2_ref[...]  # (Tc, Bt)
        val_ref[...] = vals
        hout_ref[...] = h_final

    return kernel


# --------------------------- fused-weight packing ---------------------------
def _prepare_fused_params(p, H):
    """Build the two (H, 4H) fused GRU weight halves, (1,4H) bias, fc2 row."""
    w_ih, w_hh = p["gru_w_ih"], p["gru_w_hh"]          # (H, 3H) each, cols [r|z|n]
    b_ih, b_hh = p["gru_b_ih"], p["gru_b_hh"]          # (1, 3H)
    zeros = jnp.zeros((H, H), jnp.float32)
    wgx = jnp.concatenate(
        [w_ih[:, 0:H], w_ih[:, H:2 * H], w_ih[:, 2 * H:3 * H], zeros], axis=1)
    wgh = jnp.concatenate(
        [w_hh[:, 0:H], w_hh[:, H:2 * H], zeros, w_hh[:, 2 * H:3 * H]], axis=1)
    bg = jnp.concatenate(
        [b_ih[:, 0:H] + b_hh[:, 0:H],
         b_ih[:, H:2 * H] + b_hh[:, H:2 * H],
         b_ih[:, 2 * H:3 * H],
         b_hh[:, 2 * H:3 * H]], axis=1)                               # (1, 4H)
    w2_row = p["fc2_w"].T                                             # (1, H)
    return wgx, wgh, bg, w2_row


def _largest_divisor_leq(n, cap):
    if n <= cap:
        return n
    for c in range(cap, 0, -1):
        if n % c == 0:
            return c
    return 1


# ------------------------------ public wrappers ------------------------------
def critic_forward_rollout(x_seq, h0, params, *, time_chunk=None, batch_tile=None):
    """Run the Critic over a whole sequence inside one Pallas kernel.

    Args:
      x_seq: (T, B, input_dim) float32 observations.
      h0:    (B, H) float32 initial GRU hidden (zeros when rnn_hidden is None).
      params: dict from init_critic_params.
    Returns:
      values: (T, B, 1), h_final: (B, H).
    """
    T, B, D = x_seq.shape
    H = h0.shape[1]

    if time_chunk is None:
        time_chunk = _largest_divisor_leq(T, 128)
    if batch_tile is None:
        batch_tile = B
    assert T % time_chunk == 0, "time_chunk must divide T"
    assert B % batch_tile == 0, "batch_tile must divide B"
    assert batch_tile == B or batch_tile % 128 == 0, \
        "batch_tile must equal B or be a multiple of 128"

    n_bt = B // batch_tile
    n_tc = T // time_chunk

    wgx, wgh, bg, w2_row = _prepare_fused_params(params, H)
    kernel = _make_critic_chunk_kernel(H, time_chunk)

    resident = lambda shape: pl.BlockSpec(shape, lambda b, c: (0,) * len(shape))

    values2d, h_final = pl.pallas_call(
        kernel,
        out_shape=(
            jax.ShapeDtypeStruct((T, B), jnp.float32),
            jax.ShapeDtypeStruct((B, H), jnp.float32),
        ),
        grid_spec=pltpu.PrefetchScalarGridSpec(
            num_scalar_prefetch=0,
            grid=(n_bt, n_tc),                                      # (batch, time)
            in_specs=[
                pl.BlockSpec((time_chunk, batch_tile, D),
                             lambda b, c: (c, b, 0)),               # x_seq chunk
                pl.BlockSpec((batch_tile, H), lambda b, c: (b, 0)), # h0
                resident((D, H)),                                   # fc1 W
                resident((1, H)),                                   # fc1 b
                resident((H, 4 * H)),                               # GRU Wgx
                resident((H, 4 * H)),                               # GRU Wgh
                resident((1, 4 * H)),                               # GRU b
                resident((1, H)),                                   # fc2 row
                resident((1, 1)),                                   # fc2 b
            ],
            out_specs=(
                pl.BlockSpec((time_chunk, batch_tile),
                             lambda b, c: (c, b)),                  # values chunk
                pl.BlockSpec((batch_tile, H), lambda b, c: (b, 0)), # carried hidden
            ),
            scratch_shapes=[
                pltpu.VMEM((time_chunk, batch_tile, H), jnp.float32)],
        ),
        compiler_params=pltpu.CompilerParams(
            dimension_semantics=("parallel", "arbitrary")),
    )(x_seq, h0,
      params["fc1_w"], params["fc1_b"],
      wgx, wgh, bg,
      w2_row, params["fc2_b"])

    return values2d[..., None], h_final


def critic_forward(x, h, params):
    """Single-step convenience wrapper matching the PyTorch module's forward."""
    values, h_new = critic_forward_rollout(x[None], h, params)
    return values[0], h_new


# ------------------------- deterministic param init -------------------------
def _orthogonal(key, shape, gain=1.0, dtype=jnp.float32):
    """Orthogonal init matching torch.nn.init.orthogonal_ semantics (QR-based)."""
    rows, cols = shape
    flat_shape = (rows, cols) if rows >= cols else (cols, rows)
    a = jax.random.normal(key, flat_shape, dtype)
    q, r = jnp.linalg.qr(a)
    d = jnp.sign(jnp.diag(r))
    q = q * d[None, :]
    if rows < cols:
        q = q.T
    return gain * q[:rows, :cols].astype(dtype)


def init_critic_params(key, input_dim, hidden_dim):
    """Shapes mirror the PyTorch module; weights stored as (in, out) = W_pt^T."""
    k1, k2, k3, k4 = jax.random.split(key, 4)
    H = hidden_dim
    fc1_w = _orthogonal(k1, (H, input_dim)).T                  # (input_dim, H)
    fc1_b = jnp.zeros((1, H), jnp.float32)
    gru_w_ih = _orthogonal(k2, (3 * H, H)).T                   # (H, 3H)
    gru_w_hh = _orthogonal(k3, (3 * H, H)).T                   # (H, 3H)
    gru_b_ih = jnp.zeros((1, 3 * H), jnp.float32)
    gru_b_hh = jnp.zeros((1, 3 * H), jnp.float32)
    fc2_w = _orthogonal(k4, (1, H)).T                          # (H, 1)
    fc2_b = jnp.zeros((1, 1), jnp.float32)
    return {
        "fc1_w": fc1_w, "fc1_b": fc1_b,
        "gru_w_ih": gru_w_ih, "gru_b_ih": gru_b_ih,
        "gru_w_hh": gru_w_hh, "gru_b_hh": gru_b_hh,
        "fc2_w": fc2_w, "fc2_b": fc2_b,
    }


# -------------------- pure-JAX reference (canonical params) -----------------
def critic_forward_ref(x_seq, h0, p):
    H = h0.shape[1]

    def step(h, x):
        x1 = jnp.maximum(x @ p["fc1_w"] + p["fc1_b"], 0.0)
        gi = x1 @ p["gru_w_ih"] + p["gru_b_ih"]
        gh = h @ p["gru_w_hh"] + p["gru_b_hh"]
        r = jax.nn.sigmoid(gi[:, :H] + gh[:, :H])
        z = jax.nn.sigmoid(gi[:, H:2 * H] + gh[:, H:2 * H])
        n = jnp.tanh(gi[:, 2 * H:] + r * gh[:, 2 * H:])
        h_new = (1.0 - z) * n + z * h
        v = h_new @ p["fc2_w"] + p["fc2_b"]
        return h_new, v

    h_final, values = jax.lax.scan(step, h0, x_seq)
    return values, h_final


if __name__ == "__main__":
    key = jax.random.PRNGKey(0)
    k_param, k_x = jax.random.split(key)

    batch = 8
    input_dim = 16
    hidden_dim = 32      # args.rnn_hidden_dim
    seq_len = 8          # rollout length

    params = init_critic_params(k_param, input_dim, hidden_dim)
    x_seq = jax.random.normal(k_x, (seq_len, batch, input_dim), jnp.float32)
    h0 = jnp.zeros((batch, hidden_dim), jnp.float32)   # rnn_hidden = None -> zeros

    values, h_final = critic_forward_rollout(x_seq, h0, params)
    jax.block_until_ready((values, h_final))

    # check against pure-JAX reference (un-fused canonical GRUCell math)
    values_ref, h_ref = critic_forward_ref(x_seq, h0, params)
    assert values.shape == (seq_len, batch, 1)
    assert jnp.allclose(values, values_ref, atol=1e-4, rtol=1e-4), "value mismatch"
    assert jnp.allclose(h_final, h_ref, atol=1e-4, rtol=1e-4), "hidden mismatch"

    # single-step wrapper (same semantics as one PyTorch forward() call)
    v1, h1 = critic_forward(x_seq[0], h0, params)
    jax.block_until_ready((v1, h1))
    assert jnp.allclose(v1, values_ref[0], atol=1e-4, rtol=1e-4), "step value mismatch"

    print("KERNEL_OK")
</pallas_src>

<mosaic_0001>
module attributes {stable_mosaic.version = 11 : i64} {
  func.func @kernel(%arg0: i32, %arg1: i32, %arg2: memref<8x8x16xf32, #tpu.memory_space<vmem>>, %arg3: memref<8x32xf32, #tpu.memory_space<vmem>>, %arg4: memref<16x32xf32, #tpu.memory_space<vmem>>, %arg5: memref<1x32xf32, #tpu.memory_space<vmem>>, %arg6: memref<32x128xf32, #tpu.memory_space<vmem>>, %arg7: memref<32x128xf32, #tpu.memory_space<vmem>>, %arg8: memref<1x128xf32, #tpu.memory_space<vmem>>, %arg9: memref<1x32xf32, #tpu.memory_space<vmem>>, %arg10: memref<1x1xf32, #tpu.memory_space<vmem>>, %arg11: memref<8x8xf32, #tpu.memory_space<vmem>>, %arg12: memref<8x32xf32, #tpu.memory_space<vmem>>, %arg13: memref<8x8x32xf32, #tpu.memory_space<vmem>>) attributes {dimension_semantics = [#tpu.dimension_semantics<parallel>, #tpu.dimension_semantics<arbitrary>], iteration_bounds = array<i64: 1, 1>, scalar_prefetch = 0 : i64, scratch_operands = 1 : i64, tpu.core_type = #tpu.core_type<tc>, window_params = [{transform_indices = @transform_0, window_bounds = array<i64: 8, 8, 16>}, {transform_indices = @transform_1, window_bounds = array<i64: 8, 32>}, {pipeline_mode = #tpu.pipeline_mode<synchronous>, transform_indices = @transform_2, window_bounds = array<i64: 16, 32>}, {pipeline_mode = #tpu.pipeline_mode<synchronous>, transform_indices = @transform_3, window_bounds = array<i64: 1, 32>}, {pipeline_mode = #tpu.pipeline_mode<synchronous>, transform_indices = @transform_4, window_bounds = array<i64: 32, 128>}, {pipeline_mode = #tpu.pipeline_mode<synchronous>, transform_indices = @transform_5, window_bounds = array<i64: 32, 128>}, {pipeline_mode = #tpu.pipeline_mode<synchronous>, transform_indices = @transform_6, window_bounds = array<i64: 1, 128>}, {pipeline_mode = #tpu.pipeline_mode<synchronous>, transform_indices = @transform_7, window_bounds = array<i64: 1, 32>}, {pipeline_mode = #tpu.pipeline_mode<synchronous>, transform_indices = @transform_8, window_bounds = array<i64: 1, 1>}, {transform_indices = @transform_9, window_bounds = array<i64: 8, 8>}, {transform_indices = @transform_10, window_bounds = array<i64: 8, 32>}]} {
    %c0_i32 = arith.constant 0 : i32
    %0 = arith.cmpi eq, %arg1, %c0_i32 : i32
    %1 = arith.extui %0 : i1 to i32
    %c0_i32_0 = arith.constant 0 : i32
    %2 = arith.cmpi ne, %1, %c0_i32_0 : i32
    scf.if %2 {
      %c0_112 = arith.constant 0 : index
      %c0_113 = arith.constant 0 : index
      %332 = vector.load %arg3[%c0_112, %c0_113] : memref<8x32xf32, #tpu.memory_space<vmem>>, vector<8x32xf32>
      %c0_114 = arith.constant 0 : index
      %c0_115 = arith.constant 0 : index
      %333 = vector.load %arg12[%c0_114, %c0_115] : memref<8x32xf32, #tpu.memory_space<vmem>>, vector<8x32xf32>
      tpu.vector_store %arg12[%c0_114, %c0_115], %332 {strides = array<i32>} : memref<8x32xf32, #tpu.memory_space<vmem>>, vector<8x32xf32>,
    } else {
    }
    %c0 = arith.constant 0 : index
    %c0_1 = arith.constant 0 : index
    %3 = vector.load %arg4[%c0, %c0_1] : memref<16x32xf32, #tpu.memory_space<vmem>>, vector<16x32xf32>
    %c0_2 = arith.constant 0 : index
    %c0_3 = arith.constant 0 : index
    %4 = vector.load %arg5[%c0_2, %c0_3] : memref<1x32xf32, #tpu.memory_space<vmem>>, vector<1x32xf32>
    %c0_4 = arith.constant 0 : index
    %c0_5 = arith.constant 0 : index
    %5 = vector.load %arg6[%c0_4, %c0_5] : memref<32x128xf32, #tpu.memory_space<vmem>>, vector<32x128xf32>
    %c0_6 = arith.constant 0 : index
    %c0_7 = arith.constant 0 : index
    %6 = vector.load %arg7[%c0_6, %c0_7] : memref<32x128xf32, #tpu.memory_space<vmem>>, vector<32x128xf32>
    %c0_8 = arith.constant 0 : index
    %c0_9 = arith.constant 0 : index
    %7 = vector.load %arg8[%c0_8, %c0_9] : memref<1x128xf32, #tpu.memory_space<vmem>>, vector<1x128xf32>
    %c0_10 = arith.constant 0 : index
    %c0_11 = arith.constant 0 : index
    %8 = vector.load %arg12[%c0_10, %c0_11] : memref<8x32xf32, #tpu.memory_space<vmem>>, vector<8x32xf32>
    %c0_i32_12 = arith.constant 0 : i32
    %9 = arith.index_cast %c0_i32_12 : i32 to index
    %c0_13 = arith.constant 0 : index
    %c0_14 = arith.constant 0 : index
    %10 = vector.load %arg2[%9, %c0_13, %c0_14] : memref<8x8x16xf32, #tpu.memory_space<vmem>>, vector<1x8x16xf32>
    %11 = vector.shape_cast %10 : vector<1x8x16xf32> to vector<8x16xf32>
    %cst = arith.constant dense<0.000000e+00> : vector<8x32xf32>
    %12 = tpu.matmul %11, %3, %cst {dimension_numbers = #tpu.dot_dimension_numbers<[1], [0], [0], [1], [0, 0, 1, 1], [], []>} : vector<8x16xf32>, vector<16x32xf32>, vector<8x32xf32> -> vector<8x32xf32>
    %13 = vector.broadcast %4 : vector<1x32xf32> to vector<8x32xf32>
    %14 = arith.addf %12, %13 : vector<8x32xf32>
    %cst_15 = arith.constant 0.000000e+00 : f32
    %15 = vector.broadcast %cst_15 : f32 to vector<8x32xf32>
    %16 = arith.maximumf %14, %15 : vector<8x32xf32>
    %cst_16 = arith.constant dense<0.000000e+00> : vector<8x128xf32>
    %17 = tpu.matmul %16, %5, %cst_16 {dimension_numbers = #tpu.dot_dimension_numbers<[1], [0], [0], [1], [0, 0, 1, 1], [], []>} : vector<8x32xf32>, vector<32x128xf32>, vector<8x128xf32> -> vector<8x128xf32>
    %cst_17 = arith.constant dense<0.000000e+00> : vector<8x128xf32>
    %18 = tpu.matmul %8, %6, %cst_17 {dimension_numbers = #tpu.dot_dimension_numbers<[1], [0], [0], [1], [0, 0, 1, 1], [], []>} : vector<8x32xf32>, vector<32x128xf32>, vector<8x128xf32> -> vector<8x128xf32>
    %19 = arith.addf %17, %18 : vector<8x128xf32>
    %20 = vector.broadcast %7 : vector<1x128xf32> to vector<8x128xf32>
    %21 = arith.addf %19, %20 : vector<8x128xf32>
    %22 = vector.extract_strided_slice %21 {offsets = [0, 0], sizes = [8, 32], strides = [1, 1]} : vector<8x128xf32> to vector<8x32xf32>
    %23 = arith.negf %22 : vector<8x32xf32>
    %24 = math.exp %23 : vector<8x32xf32>
    %cst_18 = arith.constant 1.000000e+00 : f32
    %25 = vector.broadcast %cst_18 : f32 to vector<8x32xf32>
    %26 = arith.addf %25, %24 : vector<8x32xf32>
    %27 = arith.divf %25, %26 : vector<8x32xf32>
    %28 = vector.extract_strided_slice %21 {offsets = [0, 32], sizes = [8, 32], strides = [1, 1]} : vector<8x128xf32> to vector<8x32xf32>
    %29 = arith.negf %28 : vector<8x32xf32>
    %30 = math.exp %29 : vector<8x32xf32>
    %cst_19 = arith.constant 1.000000e+00 : f32
    %31 = vector.broadcast %cst_19 : f32 to vector<8x32xf32>
    %32 = arith.addf %31, %30 : vector<8x32xf32>
    %33 = arith.divf %31, %32 : vector<8x32xf32>
    %34 = vector.extract_strided_slice %21 {offsets = [0, 64], sizes = [8, 32], strides = [1, 1]} : vector<8x128xf32> to vector<8x32xf32>
    %35 = vector.extract_strided_slice %21 {offsets = [0, 96], sizes = [8, 32], strides = [1, 1]} : vector<8x128xf32> to vector<8x32xf32>
    %36 = arith.mulf %27, %35 : vector<8x32xf32>
    %37 = arith.addf %34, %36 : vector<8x32xf32>
    %38 = math.tanh %37 : vector<8x32xf32>
    %cst_20 = arith.constant 1.000000e+00 : f32
    %39 = vector.broadcast %cst_20 : f32 to vector<8x32xf32>
    %40 = arith.subf %39, %33 : vector<8x32xf32>
    %41 = arith.mulf %40, %38 : vector<8x32xf32>
    %42 = arith.mulf %33, %8 : vector<8x32xf32>
    %43 = arith.addf %41, %42 : vector<8x32xf32>
    %44 = arith.index_cast %c0_i32_12 : i32 to index
    %c0_21 = arith.constant 0 : index
    %c0_22 = arith.constant 0 : index
    %45 = vector.load %arg13[%44, %c0_21, %c0_22] : memref<8x8x32xf32, #tpu.memory_space<vmem>>, vector<1x8x32xf32>
    %46 = vector.shape_cast %45 : vector<1x8x32xf32> to vector<8x32xf32>
    %47 = vector.shape_cast %43 : vector<8x32xf32> to vector<1x8x32xf32>
    tpu.vector_store %arg13[%44, %c0_21, %c0_22], %47 {strides = array<i32>} : memref<8x8x32xf32, #tpu.memory_space<vmem>>, vector<1x8x32xf32>,
    %c1_i32 = arith.constant 1 : i32
    %48 = arith.index_cast %c1_i32 : i32 to index
    %c0_23 = arith.constant 0 : index
    %c0_24 = arith.constant 0 : index
    %49 = vector.load %arg2[%48, %c0_23, %c0_24] : memref<8x8x16xf32, #tpu.memory_space<vmem>>, vector<1x8x16xf32>
    %50 = vector.shape_cast %49 : vector<1x8x16xf32> to vector<8x16xf32>
    %cst_25 = arith.constant dense<0.000000e+00> : vector<8x32xf32>
    %51 = tpu.matmul %50, %3, %cst_25 {dimension_numbers = #tpu.dot_dimension_numbers<[1], [0], [0], [1], [0, 0, 1, 1], [], []>} : vector<8x16xf32>, vector<16x32xf32>, vector<8x32xf32> -> vector<8x32xf32>
    %52 = vector.broadcast %4 : vector<1x32xf32> to vector<8x32xf32>
    %53 = arith.addf %51, %52 : vector<8x32xf32>
    %cst_26 = arith.constant 0.000000e+00 : f32
    %54 = vector.broadcast %cst_26 : f32 to vector<8x32xf32>
    %55 = arith.maximumf %53, %54 : vector<8x32xf32>
    %cst_27 = arith.constant dense<0.000000e+00> : vector<8x128xf32>
    %56 = tpu.matmul %55, %5, %cst_27 {dimension_numbers = #tpu.dot_dimension_numbers<[1], [0], [0], [1], [0, 0, 1, 1], [], []>} : vector<8x32xf32>, vector<32x128xf32>, vector<8x128xf32> -> vector<8x128xf32>
    %cst_28 = arith.constant dense<0.000000e+00> : vector<8x128xf32>
    %57 = tpu.matmul %43, %6, %cst_28 {dimension_numbers = #tpu.dot_dimension_numbers<[1], [0], [0], [1], [0, 0, 1, 1], [], []>} : vector<8x32xf32>, vector<32x128xf32>, vector<8x128xf32> -> vector<8x128xf32>
    %58 = arith.addf %56, %57 : vector<8x128xf32>
    %59 = vector.broadcast %7 : vector<1x128xf32> to vector<8x128xf32>
    %60 = arith.addf %58, %59 : vector<8x128xf32>
    %61 = vector.extract_strided_slice %60 {offsets = [0, 0], sizes = [8, 32], strides = [1, 1]} : vector<8x128xf32> to vector<8x32xf32>
    %62 = arith.negf %61 : vector<8x32xf32>
    %63 = math.exp %62 : vector<8x32xf32>
    %cst_29 = arith.constant 1.000000e+00 : f32
    %64 = vector.broadcast %cst_29 : f32 to vector<8x32xf32>
    %65 = arith.addf %64, %63 : vector<8x32xf32>
    %66 = arith.divf %64, %65 : vector<8x32xf32>
    %67 = vector.extract_strided_slice %60 {offsets = [0, 32], sizes = [8, 32], strides = [1, 1]} : vector<8x128xf32> to vector<8x32xf32>
    %68 = arith.negf %67 : vector<8x32xf32>
    %69 = math.exp %68 : vector<8x32xf32>
    %cst_30 = arith.constant 1.000000e+00 : f32
    %70 = vector.broadcast %cst_30 : f32 to vector<8x32xf32>
    %71 = arith.addf %70, %69 : vector<8x32xf32>
    %72 = arith.divf %70, %71 : vector<8x32xf32>
    %73 = vector.extract_strided_slice %60 {offsets = [0, 64], sizes = [8, 32], strides = [1, 1]} : vector<8x128xf32> to vector<8x32xf32>
    %74 = vector.extract_strided_slice %60 {offsets = [0, 96], sizes = [8, 32], strides = [1, 1]} : vector<8x128xf32> to vector<8x32xf32>
    %75 = arith.mulf %66, %74 : vector<8x32xf32>
    %76 = arith.addf %73, %75 : vector<8x32xf32>
    %77 = math.tanh %76 : vector<8x32xf32>
    %cst_31 = arith.constant 1.000000e+00 : f32
    %78 = vector.broadcast %cst_31 : f32 to vector<8x32xf32>
    %79 = arith.subf %78, %72 : vector<8x32xf32>
    %80 = arith.mulf %79, %77 : vector<8x32xf32>
    %81 = arith.mulf %72, %43 : vector<8x32xf32>
    %82 = arith.addf %80, %81 : vector<8x32xf32>
    %83 = arith.index_cast %c1_i32 : i32 to index
    %c0_32 = arith.constant 0 : index
    %c0_33 = arith.constant 0 : index
    %84 = vector.load %arg13[%83, %c0_32, %c0_33] : memref<8x8x32xf32, #tpu.memory_space<vmem>>, vector<1x8x32xf32>
    %85 = vector.shape_cast %84 : vector<1x8x32xf32> to vector<8x32xf32>
    %86 = vector.shape_cast %82 : vector<8x32xf32> to vector<1x8x32xf32>
    tpu.vector_store %arg13[%83, %c0_32, %c0_33], %86 {strides = array<i32>} : memref<8x8x32xf32, #tpu.memory_space<vmem>>, vector<1x8x32xf32>,
    %c2_i32 = arith.constant 2 : i32
    %87 = arith.index_cast %c2_i32 : i32 to index
    %c0_34 = arith.constant 0 : index
    %c0_35 = arith.constant 0 : index
    %88 = vector.load %arg2[%87, %c0_34, %c0_35] : memref<8x8x16xf32, #tpu.memory_space<vmem>>, vector<1x8x16xf32>
    %89 = vector.shape_cast %88 : vector<1x8x16xf32> to vector<8x16xf32>
    %cst_36 = arith.constant dense<0.000000e+00> : vector<8x32xf32>
    %90 = tpu.matmul %89, %3, %cst_36 {dimension_numbers = #tpu.dot_dimension_numbers<[1], [0], [0], [1], [0, 0, 1, 1], [], []>} : vector<8x16xf32>, vector<16x32xf32>, vector<8x32xf32> -> vector<8x32xf32>
    %91 = vector.broadcast %4 : vector<1x32xf32> to vector<8x32xf32>
    %92 = arith.addf %90, %91 : vector<8x32xf32>
    %cst_37 = arith.constant 0.000000e+00 : f32
    %93 = vector.broadcast %cst_37 : f32 to vector<8x32xf32>
    %94 = arith.maximumf %92, %93 : vector<8x32xf32>
    %cst_38 = arith.constant dense<0.000000e+00> : vector<8x128xf32>
    %95 = tpu.matmul %94, %5, %cst_38 {dimension_numbers = #tpu.dot_dimension_numbers<[1], [0], [0], [1], [0, 0, 1, 1], [], []>} : vector<8x32xf32>, vector<32x128xf32>, vector<8x128xf32> -> vector<8x128xf32>
    %cst_39 = arith.constant dense<0.000000e+00> : vector<8x128xf32>
    %96 = tpu.matmul %82, %6, %cst_39 {dimension_numbers = #tpu.dot_dimension_numbers<[1], [0], [0], [1], [0, 0, 1, 1], [], []>} : vector<8x32xf32>, vector<32x128xf32>, vector<8x128xf32> -> vector<8x128xf32>
    %97 = arith.addf %95, %96 : vector<8x128xf32>
    %98 = vector.broadcast %7 : vector<1x128xf32> to vector<8x128xf32>
    %99 = arith.addf %97, %98 : vector<8x128xf32>
    %100 = vector.extract_strided_slice %99 {offsets = [0, 0], sizes = [8, 32], strides = [1, 1]} : vector<8x128xf32> to vector<8x32xf32>
    %101 = arith.negf %100 : vector<8x32xf32>
    %102 = math.exp %101 : vector<8x32xf32>
    %cst_40 = arith.constant 1.000000e+00 : f32
    %103 = vector.broadcast %cst_40 : f32 to vector<8x32xf32>
    %104 = arith.addf %103, %102 : vector<8x32xf32>
    %105 = arith.divf %103, %104 : vector<8x32xf32>
    %106 = vector.extract_strided_slice %99 {offsets = [0, 32], sizes = [8, 32], strides = [1, 1]} : vector<8x128xf32> to vector<8x32xf32>
    %107 = arith.negf %106 : vector<8x32xf32>
    %108 = math.exp %107 : vector<8x32xf32>
    %cst_41 = arith.constant 1.000000e+00 : f32
    %109 = vector.broadcast %cst_41 : f32 to vector<8x32xf32>
    %110 = arith.addf %109, %108 : vector<8x32xf32>
    %111 = arith.divf %109, %110 : vector<8x32xf32>
    %112 = vector.extract_strided_slice %99 {offsets = [0, 64], sizes = [8, 32], strides = [1, 1]} : vector<8x128xf32> to vector<8x32xf32>
    %113 = vector.extract_strided_slice %99 {offsets = [0, 96], sizes = [8, 32], strides = [1, 1]} : vector<8x128xf32> to vector<8x32xf32>
    %114 = arith.mulf %105, %113 : vector<8x32xf32>
    %115 = arith.addf %112, %114 : vector<8x32xf32>
    %116 = math.tanh %115 : vector<8x32xf32>
    %cst_42 = arith.constant 1.000000e+00 : f32
    %117 = vector.broadcast %cst_42 : f32 to vector<8x32xf32>
    %118 = arith.subf %117, %111 : vector<8x32xf32>
    %119 = arith.mulf %118, %116 : vector<8x32xf32>
    %120 = arith.mulf %111, %82 : vector<8x32xf32>
    %121 = arith.addf %119, %120 : vector<8x32xf32>
    %122 = arith.index_cast %c2_i32 : i32 to index
    %c0_43 = arith.constant 0 : index
    %c0_44 = arith.constant 0 : index
    %123 = vector.load %arg13[%122, %c0_43, %c0_44] : memref<8x8x32xf32, #tpu.memory_space<vmem>>, vector<1x8x32xf32>
    %124 = vector.shape_cast %123 : vector<1x8x32xf32> to vector<8x32xf32>
    %125 = vector.shape_cast %121 : vector<8x32xf32> to vector<1x8x32xf32>
    tpu.vector_store %arg13[%122, %c0_43, %c0_44], %125 {strides = array<i32>} : memref<8x8x32xf32, #tpu.memory_space<vmem>>, vector<1x8x32xf32>,
    %c3_i32 = arith.constant 3 : i32
    %126 = arith.index_cast %c3_i32 : i32 to index
    %c0_45 = arith.constant 0 : index
    %c0_46 = arith.constant 0 : index
    %127 = vector.load %arg2[%126, %c0_45, %c0_46] : memref<8x8x16xf32, #tpu.memory_space<vmem>>, vector<1x8x16xf32>
    %128 = vector.shape_cast %127 : vector<1x8x16xf32> to vector<8x16xf32>
    %cst_47 = arith.constant dense<0.000000e+00> : vector<8x32xf32>
    %129 = tpu.matmul %128, %3, %cst_47 {dimension_numbers = #tpu.dot_dimension_numbers<[1], [0], [0], [1], [0, 0, 1, 1], [], []>} : vector<8x16xf32>, vector<16x32xf32>, vector<8x32xf32> -> vector<8x32xf32>
    %130 = vector.broadcast %4 : vector<1x32xf32> to vector<8x32xf32>
    %131 = arith.addf %129, %130 : vector<8x32xf32>
    %cst_48 = arith.constant 0.000000e+00 : f32
    %132 = vector.broadcast %cst_48 : f32 to vector<8x32xf32>
    %133 = arith.maximumf %131, %132 : vector<8x32xf32>
    %cst_49 = arith.constant dense<0.000000e+00> : vector<8x128xf32>
    %134 = tpu.matmul %133, %5, %cst_49 {dimension_numbers = #tpu.dot_dimension_numbers<[1], [0], [0], [1], [0, 0, 1, 1], [], []>} : vector<8x32xf32>, vector<32x128xf32>, vector<8x128xf32> -> vector<8x128xf32>
    %cst_50 = arith.constant dense<0.000000e+00> : vector<8x128xf32>
    %135 = tpu.matmul %121, %6, %cst_50 {dimension_numbers = #tpu.dot_dimension_numbers<[1], [0], [0], [1], [0, 0, 1, 1], [], []>} : vector<8x32xf32>, vector<32x128xf32>, vector<8x128xf32> -> vector<8x128xf32>
    %136 = arith.addf %134, %135 : vector<8x128xf32>
    %137 = vector.broadcast %7 : vector<1x128xf32> to vector<8x128xf32>
    %138 = arith.addf %136, %137 : vector<8x128xf32>
    %139 = vector.extract_strided_slice %138 {offsets = [0, 0], sizes = [8, 32], strides = [1, 1]} : vector<8x128xf32> to vector<8x32xf32>
    %140 = arith.negf %139 : vector<8x32xf32>
    %141 = math.exp %140 : vector<8x32xf32>
    %cst_51 = arith.constant 1.000000e+00 : f32
    %142 = vector.broadcast %cst_51 : f32 to vector<8x32xf32>
    %143 = arith.addf %142, %141 : vector<8x32xf32>
    %144 = arith.divf %142, %143 : vector<8x32xf32>
    %145 = vector.extract_strided_slice %138 {offsets = [0, 32], sizes = [8, 32], strides = [1, 1]} : vector<8x128xf32> to vector<8x32xf32>
    %146 = arith.negf %145 : vector<8x32xf32>
    %147 = math.exp %146 : vector<8x32xf32>
    %cst_52 = arith.constant 1.000000e+00 : f32
    %148 = vector.broadcast %cst_52 : f32 to vector<8x32xf32>
    %149 = arith.addf %148, %147 : vector<8x32xf32>
    %150 = arith.divf %148, %149 : vector<8x32xf32>
    %151 = vector.extract_strided_slice %138 {offsets = [0, 64], sizes = [8, 32], strides = [1, 1]} : vector<8x128xf32> to vector<8x32xf32>
    %152 = vector.extract_strided_slice %138 {offsets = [0, 96], sizes = [8, 32], strides = [1, 1]} : vector<8x128xf32> to vector<8x32xf32>
    %153 = arith.mulf %144, %152 : vector<8x32xf32>
    %154 = arith.addf %151, %153 : vector<8x32xf32>
    %155 = math.tanh %154 : vector<8x32xf32>
    %cst_53 = arith.constant 1.000000e+00 : f32
    %156 = vector.broadcast %cst_53 : f32 to vector<8x32xf32>
    %157 = arith.subf %156, %150 : vector<8x32xf32>
    %158 = arith.mulf %157, %155 : vector<8x32xf32>
    %159 = arith.mulf %150, %121 : vector<8x32xf32>
    %160 = arith.addf %158, %159 : vector<8x32xf32>
    %161 = arith.index_cast %c3_i32 : i32 to index
    %c0_54 = arith.constant 0 : index
    %c0_55 = arith.constant 0 : index
    %162 = vector.load %arg13[%161, %c0_54, %c0_55] : memref<8x8x32xf32, #tpu.memory_space<vmem>>, vector<1x8x32xf32>
    %163 = vector.shape_cast %162 : vector<1x8x32xf32> to vector<8x32xf32>
    %164 = vector.shape_cast %160 : vector<8x32xf32> to vector<1x8x32xf32>
    tpu.vector_store %arg13[%161, %c0_54, %c0_55], %164 {strides = array<i32>} : memref<8x8x32xf32, #tpu.memory_space<vmem>>, vector<1x8x32xf32>,
    %c4_i32 = arith.constant 4 : i32
    %165 = arith.index_cast %c4_i32 : i32 to index
    %c0_56 = arith.constant 0 : index
    %c0_57 = arith.constant 0 : index
    %166 = vector.load %arg2[%165, %c0_56, %c0_57] : memref<8x8x16xf32, #tpu.memory_space<vmem>>, vector<1x8x16xf32>
    %167 = vector.shape_cast %166 : vector<1x8x16xf32> to vector<8x16xf32>
    %cst_58 = arith.constant dense<0.000000e+00> : vector<8x32xf32>
    %168 = tpu.matmul %167, %3, %cst_58 {dimension_numbers = #tpu.dot_dimension_numbers<[1], [0], [0], [1], [0, 0, 1, 1], [], []>} : vector<8x16xf32>, vector<16x32xf32>, vector<8x32xf32> -> vector<8x32xf32>
    %169 = vector.broadcast %4 : vector<1x32xf32> to vector<8x32xf32>
    %170 = arith.addf %168, %169 : vector<8x32xf32>
    %cst_59 = arith.constant 0.000000e+00 : f32
    %171 = vector.broadcast %cst_59 : f32 to vector<8x32xf32>
    %172 = arith.maximumf %170, %171 : vector<8x32xf32>
    %cst_60 = arith.constant dense<0.000000e+00> : vector<8x128xf32>
    %173 = tpu.matmul %172, %5, %cst_60 {dimension_numbers = #tpu.dot_dimension_numbers<[1], [0], [0], [1], [0, 0, 1, 1], [], []>} : vector<8x32xf32>, vector<32x128xf32>, vector<8x128xf32> -> vector<8x128xf32>
    %cst_61 = arith.constant dense<0.000000e+00> : vector<8x128xf32>
    %174 = tpu.matmul %160, %6, %cst_61 {dimension_numbers = #tpu.dot_dimension_numbers<[1], [0], [0], [1], [0, 0, 1, 1], [], []>} : vector<8x32xf32>, vector<32x128xf32>, vector<8x128xf32> -> vector<8x128xf32>
    %175 = arith.addf %173, %174 : vector<8x128xf32>
    %176 = vector.broadcast %7 : vector<1x128xf32> to vector<8x128xf32>
    %177 = arith.addf %175, %176 : vector<8x128xf32>
    %178 = vector.extract_strided_slice %177 {offsets = [0, 0], sizes = [8, 32], strides = [1, 1]} : vector<8x128xf32> to vector<8x32xf32>
    %179 = arith.negf %178 : vector<8x32xf32>
    %180 = math.exp %179 : vector<8x32xf32>
    %cst_62 = arith.constant 1.000000e+00 : f32
    %181 = vector.broadcast %cst_62 : f32 to vector<8x32xf32>
    %182 = arith.addf %181, %180 : vector<8x32xf32>
    %183 = arith.divf %181, %182 : vector<8x32xf32>
    %184 = vector.extract_strided_slice %177 {offsets = [0, 32], sizes = [8, 32], strides = [1, 1]} : vector<8x128xf32> to vector<8x32xf32>
    %185 = arith.negf %184 : vector<8x32xf32>
    %186 = math.exp %185 : vector<8x32xf32>
    %cst_63 = arith.constant 1.000000e+00 : f32
    %187 = vector.broadcast %cst_63 : f32 to vector<8x32xf32>
    %188 = arith.addf %187, %186 : vector<8x32xf32>
    %189 = arith.divf %187, %188 : vector<8x32xf32>
    %190 = vector.extract_strided_slice %177 {offsets = [0, 64], sizes = [8, 32], strides = [1, 1]} : vector<8x128xf32> to vector<8x32xf32>
    %191 = vector.extract_strided_slice %177 {offsets = [0, 96], sizes = [8, 32], strides = [1, 1]} : vector<8x128xf32> to vector<8x32xf32>
    %192 = arith.mulf %183, %191 : vector<8x32xf32>
    %193 = arith.addf %190, %192 : vector<8x32xf32>
    %194 = math.tanh %193 : vector<8x32xf32>
    %cst_64 = arith.constant 1.000000e+00 : f32
    %195 = vector.broadcast %cst_64 : f32 to vector<8x32xf32>
    %196 = arith.subf %195, %189 : vector<8x32xf32>
    %197 = arith.mulf %196, %194 : vector<8x32xf32>
    %198 = arith.mulf %189, %160 : vector<8x32xf32>
    %199 = arith.addf %197, %198 : vector<8x32xf32>
    %200 = arith.index_cast %c4_i32 : i32 to index
    %c0_65 = arith.constant 0 : index
    %c0_66 = arith.constant 0 : index
    %201 = vector.load %arg13[%200, %c0_65, %c0_66] : memref<8x8x32xf32, #tpu.memory_space<vmem>>, vector<1x8x32xf32>
    %202 = vector.shape_cast %201 : vector<1x8x32xf32> to vector<8x32xf32>
    %203 = vector.shape_cast %199 : vector<8x32xf32> to vector<1x8x32xf32>
    tpu.vector_store %arg13[%200, %c0_65, %c0_66], %203 {strides = array<i32>} : memref<8x8x32xf32, #tpu.memory_space<vmem>>, vector<1x8x32xf32>,
    %c5_i32 = arith.constant 5 : i32
    %204 = arith.index_cast %c5_i32 : i32 to index
    %c0_67 = arith.constant 0 : index
    %c0_68 = arith.constant 0 : index
    %205 = vector.load %arg2[%204, %c0_67, %c0_68] : memref<8x8x16xf32, #tpu.memory_space<vmem>>, vector<1x8x16xf32>
    %206 = vector.shape_cast %205 : vector<1x8x16xf32> to vector<8x16xf32>
    %cst_69 = arith.constant dense<0.000000e+00> : vector<8x32xf32>
    %207 = tpu.matmul %206, %3, %cst_69 {dimension_numbers = #tpu.dot_dimension_numbers<[1], [0], [0], [1], [0, 0, 1, 1], [], []>} : vector<8x16xf32>, vector<16x32xf32>, vector<8x32xf32> -> vector<8x32xf32>
    %208 = vector.broadcast %4 : vector<1x32xf32> to vector<8x32xf32>
    %209 = arith.addf %207, %208 : vector<8x32xf32>
    %cst_70 = arith.constant 0.000000e+00 : f32
    %210 = vector.broadcast %cst_70 : f32 to vector<8x32xf32>
    %211 = arith.maximumf %209, %210 : vector<8x32xf32>
    %cst_71 = arith.constant dense<0.000000e+00> : vector<8x128xf32>
    %212 = tpu.matmul %211, %5, %cst_71 {dimension_numbers = #tpu.dot_dimension_numbers<[1], [0], [0], [1], [0, 0, 1, 1], [], []>} : vector<8x32xf32>, vector<32x128xf32>, vector<8x128xf32> -> vector<8x128xf32>
    %cst_72 = arith.constant dense<0.000000e+00> : vector<8x128xf32>
    %213 = tpu.matmul %199, %6, %cst_72 {dimension_numbers = #tpu.dot_dimension_numbers<[1], [0], [0], [1], [0, 0, 1, 1], [], []>} : vector<8x32xf32>, vector<32x128xf32>, vector<8x128xf32> -> vector<8x128xf32>
    %214 = arith.addf %212, %213 : vector<8x128xf32>
    %215 = vector.broadcast %7 : vector<1x128xf32> to vector<8x128xf32>
    %216 = arith.addf %214, %215 : vector<8x128xf32>
    %217 = vector.extract_strided_slice %216 {offsets = [0, 0], sizes = [8, 32], strides = [1, 1]} : vector<8x128xf32> to vector<8x32xf32>
    %218 = arith.negf %217 : vector<8x32xf32>
    %219 = math.exp %218 : vector<8x32xf32>
    %cst_73 = arith.constant 1.000000e+00 : f32
    %220 = vector.broadcast %cst_73 : f32 to vector<8x32xf32>
    %221 = arith.addf %220, %219 : vector<8x32xf32>
    %222 = arith.divf %220, %221 : vector<8x32xf32>
    %223 = vector.extract_strided_slice %216 {offsets = [0, 32], sizes = [8, 32], strides = [1, 1]} : vector<8x128xf32> to vector<8x32xf32>
    %224 = arith.negf %223 : vector<8x32xf32>
    %225 = math.exp %224 : vector<8x32xf32>
    %cst_74 = arith.constant 1.000000e+00 : f32
    %226 = vector.broadcast %cst_74 : f32 to vector<8x32xf32>
    %227 = arith.addf %226, %225 : vector<8x32xf32>
    %228 = arith.divf %226, %227 : vector<8x32xf32>
    %229 = vector.extract_strided_slice %216 {offsets = [0, 64], sizes = [8, 32], strides = [1, 1]} : vector<8x128xf32> to vector<8x32xf32>
    %230 = vector.extract_strided_slice %216 {offsets = [0, 96], sizes = [8, 32], strides = [1, 1]} : vector<8x128xf32> to vector<8x32xf32>
    %231 = arith.mulf %222, %230 : vector<8x32xf32>
    %232 = arith.addf %229, %231 : vector<8x32xf32>
    %233 = math.tanh %232 : vector<8x32xf32>
    %cst_75 = arith.constant 1.000000e+00 : f32
    %234 = vector.broadcast %cst_75 : f32 to vector<8x32xf32>
    %235 = arith.subf %234, %228 : vector<8x32xf32>
    %236 = arith.mulf %235, %233 : vector<8x32xf32>
    %237 = arith.mulf %228, %199 : vector<8x32xf32>
    %238 = arith.addf %236, %237 : vector<8x32xf32>
    %239 = arith.index_cast %c5_i32 : i32 to index
    %c0_76 = arith.constant 0 : index
    %c0_77 = arith.constant 0 : index
    %240 = vector.load %arg13[%239, %c0_76, %c0_77] : memref<8x8x32xf32, #tpu.memory_space<vmem>>, vector<1x8x32xf32>
    %241 = vector.shape_cast %240 : vector<1x8x32xf32> to vector<8x32xf32>
    %242 = vector.shape_cast %238 : vector<8x32xf32> to vector<1x8x32xf32>
    tpu.vector_store %arg13[%239, %c0_76, %c0_77], %242 {strides = array<i32>} : memref<8x8x32xf32, #tpu.memory_space<vmem>>, vector<1x8x32xf32>,
    %c6_i32 = arith.constant 6 : i32
    %243 = arith.index_cast %c6_i32 : i32 to index
    %c0_78 = arith.constant 0 : index
    %c0_79 = arith.constant 0 : index
    %244 = vector.load %arg2[%243, %c0_78, %c0_79] : memref<8x8x16xf32, #tpu.memory_space<vmem>>, vector<1x8x16xf32>
    %245 = vector.shape_cast %244 : vector<1x8x16xf32> to vector<8x16xf32>
    %cst_80 = arith.constant dense<0.000000e+00> : vector<8x32xf32>
    %246 = tpu.matmul %245, %3, %cst_80 {dimension_numbers = #tpu.dot_dimension_numbers<[1], [0], [0], [1], [0, 0, 1, 1], [], []>} : vector<8x16xf32>, vector<16x32xf32>, vector<8x32xf32> -> vector<8x32xf32>
    %247 = vector.broadcast %4 : vector<1x32xf32> to vector<8x32xf32>
    %248 = arith.addf %246, %247 : vector<8x32xf32>
    %cst_81 = arith.constant 0.000000e+00 : f32
    %249 = vector.broadcast %cst_81 : f32 to vector<8x32xf32>
    %250 = arith.maximumf %248, %249 : vector<8x32xf32>
    %cst_82 = arith.constant dense<0.000000e+00> : vector<8x128xf32>
    %251 = tpu.matmul %250, %5, %cst_82 {dimension_numbers = #tpu.dot_dimension_numbers<[1], [0], [0], [1], [0, 0, 1, 1], [], []>} : vector<8x32xf32>, vector<32x128xf32>, vector<8x128xf32> -> vector<8x128xf32>
    %cst_83 = arith.constant dense<0.000000e+00> : vector<8x128xf32>
    %252 = tpu.matmul %238, %6, %cst_83 {dimension_numbers = #tpu.dot_dimension_numbers<[1], [0], [0], [1], [0, 0, 1, 1], [], []>} : vector<8x32xf32>, vector<32x128xf32>, vector<8x128xf32> -> vector<8x128xf32>
    %253 = arith.addf %251, %252 : vector<8x128xf32>
    %254 = vector.broadcast %7 : vector<1x128xf32> to vector<8x128xf32>
    %255 = arith.addf %253, %254 : vector<8x128xf32>
    %256 = vector.extract_strided_slice %255 {offsets = [0, 0], sizes = [8, 32], strides = [1, 1]} : vector<8x128xf32> to vector<8x32xf32>
    %257 = arith.negf %256 : vector<8x32xf32>
    %258 = math.exp %257 : vector<8x32xf32>
    %cst_84 = arith.constant 1.000000e+00 : f32
    %259 = vector.broadcast %cst_84 : f32 to vector<8x32xf32>
    %260 = arith.addf %259, %258 : vector<8x32xf32>
    %261 = arith.divf %259, %260 : vector<8x32xf32>
    %262 = vector.extract_strided_slice %255 {offsets = [0, 32], sizes = [8, 32], strides = [1, 1]} : vector<8x128xf32> to vector<8x32xf32>
    %263 = arith.negf %262 : vector<8x32xf32>
    %264 = math.exp %263 : vector<8x32xf32>
    %cst_85 = arith.constant 1.000000e+00 : f32
    %265 = vector.broadcast %cst_85 : f32 to vector<8x32xf32>
    %266 = arith.addf %265, %264 : vector<8x32xf32>
    %267 = arith.divf %265, %266 : vector<8x32xf32>
    %268 = vector.extract_strided_slice %255 {offsets = [0, 64], sizes = [8, 32], strides = [1, 1]} : vector<8x128xf32> to vector<8x32xf32>
    %269 = vector.extract_strided_slice %255 {offsets = [0, 96], sizes = [8, 32], strides = [1, 1]} : vector<8x128xf32> to vector<8x32xf32>
    %270 = arith.mulf %261, %269 : vector<8x32xf32>
    %271 = arith.addf %268, %270 : vector<8x32xf32>
    %272 = math.tanh %271 : vector<8x32xf32>
    %cst_86 = arith.constant 1.000000e+00 : f32
    %273 = vector.broadcast %cst_86 : f32 to vector<8x32xf32>
    %274 = arith.subf %273, %267 : vector<8x32xf32>
    %275 = arith.mulf %274, %272 : vector<8x32xf32>
    %276 = arith.mulf %267, %238 : vector<8x32xf32>
    %277 = arith.addf %275, %276 : vector<8x32xf32>
    %278 = arith.index_cast %c6_i32 : i32 to index
    %c0_87 = arith.constant 0 : index
    %c0_88 = arith.constant 0 : index
    %279 = vector.load %arg13[%278, %c0_87, %c0_88] : memref<8x8x32xf32, #tpu.memory_space<vmem>>, vector<1x8x32xf32>
    %280 = vector.shape_cast %279 : vector<1x8x32xf32> to vector<8x32xf32>
    %281 = vector.shape_cast %277 : vector<8x32xf32> to vector<1x8x32xf32>
    tpu.vector_store %arg13[%278, %c0_87, %c0_88], %281 {strides = array<i32>} : memref<8x8x32xf32, #tpu.memory_space<vmem>>, vector<1x8x32xf32>,
    %c7_i32 = arith.constant 7 : i32
    %282 = arith.index_cast %c7_i32 : i32 to index
    %c0_89 = arith.constant 0 : index
    %c0_90 = arith.constant 0 : index
    %283 = vector.load %arg2[%282, %c0_89, %c0_90] : memref<8x8x16xf32, #tpu.memory_space<vmem>>, vector<1x8x16xf32>
    %284 = vector.shape_cast %283 : vector<1x8x16xf32> to vector<8x16xf32>
    %cst_91 = arith.constant dense<0.000000e+00> : vector<8x32xf32>
    %285 = tpu.matmul %284, %3, %cst_91 {dimension_numbers = #tpu.dot_dimension_numbers<[1], [0], [0], [1], [0, 0, 1, 1], [], []>} : vector<8x16xf32>, vector<16x32xf32>, vector<8x32xf32> -> vector<8x32xf32>
    %286 = vector.broadcast %4 : vector<1x32xf32> to vector<8x32xf32>
    %287 = arith.addf %285, %286 : vector<8x32xf32>
    %cst_92 = arith.constant 0.000000e+00 : f32
    %288 = vector.broadcast %cst_92 : f32 to vector<8x32xf32>
    %289 = arith.maximumf %287, %288 : vector<8x32xf32>
    %cst_93 = arith.constant dense<0.000000e+00> : vector<8x128xf32>
    %290 = tpu.matmul %289, %5, %cst_93 {dimension_numbers = #tpu.dot_dimension_numbers<[1], [0], [0], [1], [0, 0, 1, 1], [], []>} : vector<8x32xf32>, vector<32x128xf32>, vector<8x128xf32> -> vector<8x128xf32>
    %cst_94 = arith.constant dense<0.000000e+00> : vector<8x128xf32>
    %291 = tpu.matmul %277, %6, %cst_94 {dimension_numbers = #tpu.dot_dimension_numbers<[1], [0], [0], [1], [0, 0, 1, 1], [], []>} : vector<8x32xf32>, vector<32x128xf32>, vector<8x128xf32> -> vector<8x128xf32>
    %292 = arith.addf %290, %291 : vector<8x128xf32>
    %293 = vector.broadcast %7 : vector<1x128xf32> to vector<8x128xf32>
    %294 = arith.addf %292, %293 : vector<8x128xf32>
    %295 = vector.extract_strided_slice %294 {offsets = [0, 0], sizes = [8, 32], strides = [1, 1]} : vector<8x128xf32> to vector<8x32xf32>
    %296 = arith.negf %295 : vector<8x32xf32>
    %297 = math.exp %296 : vector<8x32xf32>
    %cst_95 = arith.constant 1.000000e+00 : f32
    %298 = vector.broadcast %cst_95 : f32 to vector<8x32xf32>
    %299 = arith.addf %298, %297 : vector<8x32xf32>
    %300 = arith.divf %298, %299 : vector<8x32xf32>
    %301 = vector.extract_strided_slice %294 {offsets = [0, 32], sizes = [8, 32], strides = [1, 1]} : vector<8x128xf32> to vector<8x32xf32>
    %302 = arith.negf %301 : vector<8x32xf32>
    %303 = math.exp %302 : vector<8x32xf32>
    %cst_96 = arith.constant 1.000000e+00 : f32
    %304 = vector.broadcast %cst_96 : f32 to vector<8x32xf32>
    %305 = arith.addf %304, %303 : vector<8x32xf32>
    %306 = arith.divf %304, %305 : vector<8x32xf32>
    %307 = vector.extract_strided_slice %294 {offsets = [0, 64], sizes = [8, 32], strides = [1, 1]} : vector<8x128xf32> to vector<8x32xf32>
    %308 = vector.extract_strided_slice %294 {offsets = [0, 96], sizes = [8, 32], strides = [1, 1]} : vector<8x128xf32> to vector<8x32xf32>
    %309 = arith.mulf %300, %308 : vector<8x32xf32>
    %310 = arith.addf %307, %309 : vector<8x32xf32>
    %311 = math.tanh %310 : vector<8x32xf32>
    %cst_97 = arith.constant 1.000000e+00 : f32
    %312 = vector.broadcast %cst_97 : f32 to vector<8x32xf32>
    %313 = arith.subf %312, %306 : vector<8x32xf32>
    %314 = arith.mulf %313, %311 : vector<8x32xf32>
    %315 = arith.mulf %306, %277 : vector<8x32xf32>
    %316 = arith.addf %314, %315 : vector<8x32xf32>
    %317 = arith.index_cast %c7_i32 : i32 to index
    %c0_98 = arith.constant 0 : index
    %c0_99 = arith.constant 0 : index
    %318 = vector.load %arg13[%317, %c0_98, %c0_99] : memref<8x8x32xf32, #tpu.memory_space<vmem>>, vector<1x8x32xf32>
    %319 = vector.shape_cast %318 : vector<1x8x32xf32> to vector<8x32xf32>
    %320 = vector.shape_cast %316 : vector<8x32xf32> to vector<1x8x32xf32>
    tpu.vector_store %arg13[%317, %c0_98, %c0_99], %320 {strides = array<i32>} : memref<8x8x32xf32, #tpu.memory_space<vmem>>, vector<1x8x32xf32>,
    %c8_i32 = arith.constant 8 : i32
    %c0_100 = arith.constant 0 : index
    %c0_101 = arith.constant 0 : index
    %c0_102 = arith.constant 0 : index
    %321 = vector.load %arg13[%c0_100, %c0_101, %c0_102] : memref<8x8x32xf32, #tpu.memory_space<vmem>>, vector<8x8x32xf32>
    %c0_103 = arith.constant 0 : index
    %c0_104 = arith.constant 0 : index
    %322 = vector.load %arg9[%c0_103, %c0_104] : memref<1x32xf32, #tpu.memory_space<vmem>>, vector<1x32xf32>
    %323 = vector.shape_cast %322 : vector<1x32xf32> to vector<1x1x32xf32>
    %324 = vector.broadcast %323 : vector<1x1x32xf32> to vector<8x8x32xf32>
    %325 = arith.mulf %321, %324 : vector<8x8x32xf32>
    %cst_105 = arith.constant dense<0.000000e+00> : vector<8x8xf32>
    %326 = vector.multi_reduction <add>, %325, %cst_105 [2] : vector<8x8x32xf32> to vector<8x8xf32>
    %c0_106 = arith.constant 0 : index
    %c0_107 = arith.constant 0 : index
    %327 = vector.load %arg10[%c0_106, %c0_107] : memref<1x1xf32, #tpu.memory_space<vmem>>, vector<1x1xf32>
    %328 = vector.broadcast %327 : vector<1x1xf32> to vector<8x8xf32>
    %329 = arith.addf %326, %328 : vector<8x8xf32>
    %c0_108 = arith.constant 0 : index
    %c0_109 = arith.constant 0 : index
    %330 = vector.load %arg11[%c0_108, %c0_109] : memref<8x8xf32, #tpu.memory_space<vmem>>, vector<8x8xf32>
    tpu.vector_store %arg11[%c0_108, %c0_109], %329 {strides = array<i32>} : memref<8x8xf32, #tpu.memory_space<vmem>>, vector<8x8xf32>,
    %c0_110 = arith.constant 0 : index
    %c0_111 = arith.constant 0 : index
    %331 = vector.load %arg12[%c0_110, %c0_111] : memref<8x32xf32, #tpu.memory_space<vmem>>, vector<8x32xf32>
    tpu.vector_store %arg12[%c0_110, %c0_111], %316 {strides = array<i32>} : memref<8x32xf32, #tpu.memory_space<vmem>>, vector<8x32xf32>,
    return
  }
  func.func @transform_0(%arg0: i32, %arg1: i32) -> (i32, i32, i32) {
    %c0_i32 = arith.constant 0 : i32
    %c0_i32_0 = arith.constant 0 : i32
    return %arg1, %arg0, %c0_i32 : i32, i32, i32
  }
  func.func @transform_1(%arg0: i32, %arg1: i32) -> (i32, i32) {
    %c0_i32 = arith.constant 0 : i32
    %c0_i32_0 = arith.constant 0 : i32
    return %arg0, %c0_i32 : i32, i32
  }
  func.func @transform_2(%arg0: i32, %arg1: i32) -> (i32, i32) {
    %c0_i32 = arith.constant 0 : i32
    %c0_i32_0 = arith.constant 0 : i32
    %c0_i32_1 = arith.constant 0 : i32
    return %c0_i32, %c0_i32_0 : i32, i32
  }
  func.func @transform_3(%arg0: i32, %arg1: i32) -> (i32, i32) {
    %c0_i32 = arith.constant 0 : i32
    %c0_i32_0 = arith.constant 0 : i32
    %c0_i32_1 = arith.constant 0 : i32
    return %c0_i32, %c0_i32_0 : i32, i32
  }
  func.func @transform_4(%arg0: i32, %arg1: i32) -> (i32, i32) {
    %c0_i32 = arith.constant 0 : i32
    %c0_i32_0 = arith.constant 0 : i32
    %c0_i32_1 = arith.constant 0 : i32
    return %c0_i32, %c0_i32_0 : i32, i32
  }
  func.func @transform_5(%arg0: i32, %arg1: i32) -> (i32, i32) {
    %c0_i32 = arith.constant 0 : i32
    %c0_i32_0 = arith.constant 0 : i32
    %c0_i32_1 = arith.constant 0 : i32
    return %c0_i32, %c0_i32_0 : i32, i32
  }
  func.func @transform_6(%arg0: i32, %arg1: i32) -> (i32, i32) {
    %c0_i32 = arith.constant 0 : i32
    %c0_i32_0 = arith.constant 0 : i32
    %c0_i32_1 = arith.constant 0 : i32
    return %c0_i32, %c0_i32_0 : i32, i32
  }
  func.func @transform_7(%arg0: i32, %arg1: i32) -> (i32, i32) {
    %c0_i32 = arith.constant 0 : i32
    %c0_i32_0 = arith.constant 0 : i32
    %c0_i32_1 = arith.constant 0 : i32
    return %c0_i32, %c0_i32_0 : i32, i32
  }
  func.func @transform_8(%arg0: i32, %arg1: i32) -> (i32, i32) {
    %c0_i32 = arith.constant 0 : i32
    %c0_i32_0 = arith.constant 0 : i32
    %c0_i32_1 = arith.constant 0 : i32
    return %c0_i32, %c0_i32_0 : i32, i32
  }
  func.func @transform_9(%arg0: i32, %arg1: i32) -> (i32, i32) {
    %c0_i32 = arith.constant 0 : i32
    return %arg1, %arg0 : i32, i32
  }
  func.func @transform_10(%arg0: i32, %arg1: i32) -> (i32, i32) {
    %c0_i32 = arith.constant 0 : i32
    %c0_i32_0 = arith.constant 0 : i32
    return %arg0, %c0_i32 : i32, i32
  }
}

</mosaic_0001>

<llo_original>
// kernel: tpu_custom_call.1
$region0: #{tpu_custom_call.1}
  #allocation0 [shape = 'u32[]', space=smem, size = 0x4, offset = 0x4, fixed_abs, tag = 'smem constant byte address 0x4 - core index']
  #allocation1 [shape = 'u32[144,128]{1,0:T(1,128)}', space=vmem, size = 0x12000, scoped, tag = 'internal scratch']
  #allocation2 [shape = 'f32[8,8,32]{2,1,0:T(8,128)}', space=vmem, size = 0x8000, scoped, tag = 'scratch operand']
  #allocation3 [shape = 'f32[1,1]{1,0:T(1,128)S(1)}', space=vmem, size = 0x200, scoped, tag = 'scoped memory for tpu_custom_call.1']
  %s0 = inlined_call_operand.hbm [shape: f32[8,8,16], index: 0, kind: input, shape index: {}]
  %s1 = inlined_call_operand.hbm [shape: f32[8,32], index: 1, kind: input, shape index: {}]
  %s2 = inlined_call_operand.hbm [shape: f32[16,32], index: 2, kind: input, shape index: {}]
  %s3 = inlined_call_operand.vmem [shape: f32[1,32], index: 3, kind: input, shape index: {}]
  %s4 = inlined_call_operand.hbm [shape: f32[32,128], index: 4, kind: input, shape index: {}]
  %s5 = inlined_call_operand.hbm [shape: f32[32,128], index: 5, kind: input, shape index: {}]
  %s6 = inlined_call_operand.vmem [shape: f32[1,128], index: 6, kind: input, shape index: {}]
  %s7 = inlined_call_operand.vmem [shape: f32[1,32], index: 7, kind: input, shape index: {}]
  %s8 = inlined_call_operand.<no memory space> [shape: f32[1,1], index: 8, kind: input, shape index: {}]
  %s9 = inlined_call_operand.hbm [shape: f32[8,8], index: 9, kind: output, shape index: {0}]
  %s10 = inlined_call_operand.hbm [shape: f32[8,32], index: 10, kind: output, shape index: {1}]
  %11 = xla_tuple %s9, %s10
  %s12 = sld [smem:[#allocation0]]
  $region78: #{tpu_custom_call.1} parent=0
    _
  %s14 = ssub.s32 1, %s12
  %s15 = scalar_select 0, %s14, %s12
  %v16 = vstv %s8
  %17 = vst [vmem:[#allocation3] sm:$0x1] %v16
  $region1: #{tpu_custom_call.1} parent=0
    #allocation4 [shape = 'u8[32768]{0}', space=vmem, size = 0x8000, scoped, tag = 'input window, operand 0, single buffered']
    #allocation5 [shape = 's32[1]{0}', space=sflag, size = 0x4, scoped, tag = 'scoped memory for tpu_custom_call.1']
    #allocation6 [shape = 's32[1]{0}', space=sflag, size = 0x4, scoped, tag = 'scoped memory for tpu_custom_call.1']
    #allocation7 [shape = 'u8[4096]{0}', space=vmem, size = 0x1000, scoped, tag = 'input window, operand 1, single buffered']
    #allocation8 [shape = 's32[1]{0}', space=sflag, size = 0x4, scoped, tag = 'scoped memory for tpu_custom_call.1']
    #allocation9 [shape = 'u8[8192]{0}', space=vmem, size = 0x2000, scoped, tag = 'input window, operand 2, single buffered']
    #allocation10 [shape = 'u8[16384]{0}', space=vmem, size = 0x4000, scoped, tag = 'input window, operand 4, single buffered']
    #allocation11 [shape = 's32[1]{0}', space=sflag, size = 0x4, scoped, tag = 'scoped memory for tpu_custom_call.1']
    #allocation12 [shape = 'u8[16384]{0}', space=vmem, size = 0x4000, scoped, tag = 'input window, operand 5, single buffered']
    #allocation13 [shape = 'u8[4096]{0}', space=vmem, size = 0x1000, scoped, tag = 'output window, operand 0, single buffered']
    #allocation14 [shape = 'u8[4096]{0}', space=vmem, size = 0x1000, scoped, tag = 'output window, operand 1, single buffered']
    #allocation15 [shape = 's32[1]{0}', space=sflag, size = 0x4, scoped, tag = 'scoped memory for tpu_custom_call.1']
    %18 = vsyncpa [#allocation5], 0
    %19 = vsyncpa [#allocation8], 0
    %20 = vsyncpa [#allocation11], 0
    %21 = vsyncpa [#allocation6], 0
    %22 = vsyncpa [#allocation15], 0
    // Predicated region
    $region2: #{tpu_custom_call.1} parent=1 // pred_check
      _
    $region3: #{tpu_custom_call.1} parent=1 // pred_check_branch
      %24 = sbr.rel (0) target = $region5
    $region4: #{tpu_custom_call.1} parent=1 // pred_region
      %s26 = ssub.s32 1024, 1024
      %27 = vsyncadd [#allocation5], %s26
      %s28 = sshll.u32 [#allocation4], 4
      %s29 = int_to_ptr.vmem [resolvable:$true] %s28
      %34 = dma.hbm_to_vmem [thread:$0]  %s0, 1024, %s29, [#allocation5], 128, 128, 8
    $region5: #{tpu_custom_call.1} parent=1 // pred_fallthru
      _
    // Predicated region
    $region6: #{tpu_custom_call.1} parent=1 // pred_check
      _
    $region7: #{tpu_custom_call.1} parent=1 // pred_check_branch
      %36 = sbr.rel (0) target = $region9
    $region8: #{tpu_custom_call.1} parent=1 // pred_region
      %s38 = ssub.s32 128, 128
      %39 = vsyncadd [#allocation8], %s38
      %s41 = sshll.u32 [#allocation7], 4
      %s42 = int_to_ptr.vmem [resolvable:$true] %s41
      %44 = dma.hbm_to_vmem [thread:$0]  %s1, 128, %s42, [#allocation8]
    $region9: #{tpu_custom_call.1} parent=1 // pred_fallthru
      _
    // Predicated region
    $region10: #{tpu_custom_call.1} parent=1 // pred_check
      _
    $region11: #{tpu_custom_call.1} parent=1 // pred_check_branch
      %46 = sbr.rel (0) target = $region13
    $region12: #{tpu_custom_call.1} parent=1 // pred_region
      %s48 = ssub.s32 256, 256
      %49 = vsyncadd [#allocation8], %s48
      %s50 = sshll.u32 [#allocation9], 4
      %s51 = int_to_ptr.vmem [resolvable:$true] %s50
      %56 = dma.hbm_to_vmem [thread:$0]  %s2, 256, %s51, [#allocation8], 128, 128, 8
    $region13: #{tpu_custom_call.1} parent=1 // pred_fallthru
      _
    // Predicated region
    $region14: #{tpu_custom_call.1} parent=1 // pred_check
      _
    $region15: #{tpu_custom_call.1} parent=1 // pred_check_branch
      %58 = sbr.rel (0) target = $region17
    $region16: #{tpu_custom_call.1} parent=1 // pred_region
      _
    $region17: #{tpu_custom_call.1} parent=1 // pred_fallthru
      _
    // Predicated region
    $region18: #{tpu_custom_call.1} parent=1 // pred_check
      _
    $region19: #{tpu_custom_call.1} parent=1 // pred_check_branch
      %60 = sbr.rel (0) target = $region21
    $region20: #{tpu_custom_call.1} parent=1 // pred_region
      %s62 = ssub.s32 512, 512
      %63 = vsyncadd [#allocation11], %s62
      %s64 = sshll.u32 [#allocation10], 4
      %s65 = int_to_ptr.vmem [resolvable:$true] %s64
      %70 = dma.hbm_to_vmem [thread:$0]  %s4, 512, %s65, [#allocation11], 128, 128, 8
    $region21: #{tpu_custom_call.1} parent=1 // pred_fallthru
      _
    // Predicated region
    $region22: #{tpu_custom_call.1} parent=1 // pred_check
      _
    $region23: #{tpu_custom_call.1} parent=1 // pred_check_branch
      %72 = sbr.rel (0) target = $region25
    $region24: #{tpu_custom_call.1} parent=1 // pred_region
      %s74 = ssub.s32 512, 512
      %75 = vsyncadd [#allocation11], %s74
      %s76 = sshll.u32 [#allocation12], 4
      %s77 = int_to_ptr.vmem [resolvable:$true] %s76
      %82 = dma.hbm_to_vmem [thread:$0]  %s5, 512, %s77, [#allocation11], 128, 128, 8
    $region25: #{tpu_custom_call.1} parent=1 // pred_fallthru
      _
    // Predicated region
    $region26: #{tpu_custom_call.1} parent=1 // pred_check
      _
    $region27: #{tpu_custom_call.1} parent=1 // pred_check_branch
      %84 = sbr.rel (0) target = $region29
    $region28: #{tpu_custom_call.1} parent=1 // pred_region
      _
    $region29: #{tpu_custom_call.1} parent=1 // pred_fallthru
      _
    // Predicated region
    $region30: #{tpu_custom_call.1} parent=1 // pred_check
      _
    $region31: #{tpu_custom_call.1} parent=1 // pred_check_branch
      %86 = sbr.rel (0) target = $region33
    $region32: #{tpu_custom_call.1} parent=1 // pred_region
      _
    $region33: #{tpu_custom_call.1} parent=1 // pred_fallthru
      _
    // Predicated region
    $region34: #{tpu_custom_call.1} parent=1 // pred_check
      _
    $region35: #{tpu_custom_call.1} parent=1 // pred_check_branch
      %88 = sbr.rel (0) target = $region37
    $region36: #{tpu_custom_call.1} parent=1 // pred_region
      _
    $region37: #{tpu_custom_call.1} parent=1 // pred_fallthru
      _
    // Predicated region
    $region38: #{tpu_custom_call.1} parent=1 // pred_check
      _
    $region39: #{tpu_custom_call.1} parent=1 // pred_check_branch
      %90 = sbr.rel (0) target = $region41
    $region40: #{tpu_custom_call.1} parent=1 // pred_region
      %91 = dma.done [#allocation5], 1024
    $region41: #{tpu_custom_call.1} parent=1 // pred_fallthru
      _
    // Predicated region
    $region42: #{tpu_custom_call.1} parent=1 // pred_check
      _
    $region43: #{tpu_custom_call.1} parent=1 // pred_check_branch
      %93 = sbr.rel (0) target = $region45
    $region44: #{tpu_custom_call.1} parent=1 // pred_region
      %94 = dma.done [#allocation8], 128
    $region45: #{tpu_custom_call.1} parent=1 // pred_fallthru
      _
    // Predicated region
    $region46: #{tpu_custom_call.1} parent=1 // pred_check
      _
    $region47: #{tpu_custom_call.1} parent=1 // pred_check_branch
      %96 = sbr.rel (0) target = $region49
    $region48: #{tpu_custom_call.1} parent=1 // pred_region
      %97 = dma.done [#allocation8], 256
    $region49: #{tpu_custom_call.1} parent=1 // pred_fallthru
      _
    // Predicated region
    $region50: #{tpu_custom_call.1} parent=1 // pred_check
      _
    $region51: #{tpu_custom_call.1} parent=1 // pred_check_branch
      %99 = sbr.rel (0) target = $region53
    $region52: #{tpu_custom_call.1} parent=1 // pred_region
      %100 = dma.done [#allocation11], 512
    $region53: #{tpu_custom_call.1} parent=1 // pred_fallthru
      _
    // Predicated region
    $region54: #{tpu_custom_call.1} parent=1 // pred_check
      _
    $region55: #{tpu_custom_call.1} parent=1 // pred_check_branch
      %102 = sbr.rel (0) target = $region57
    $region56: #{tpu_custom_call.1} parent=1 // pred_region
      %103 = dma.done [#allocation11], 512
    $region57: #{tpu_custom_call.1} parent=1 // pred_fallthru
      _
    %p104 = scmp.eq.s32.totalorder 0, 0
    // Predicated region
    $region58: #{tpu_custom_call.1} parent=1 // pred_check
      %p105 = pneg %p104
    $region59: #{tpu_custom_call.1} parent=1 // pred_check_branch
      %107 = sbr.rel (%p105) target = $region61
    $region60: #{tpu_custom_call.1} parent=1 // pred_region
      %v108 = vld [vmem:[#allocation7] sm:$0xff]
      %vm109 = vcmask 261120
      %110 = vst.msk [vmem:[#allocation14] sm:$0xff] %vm109, %v108
    $region61: #{tpu_custom_call.1} parent=1 // pred_fallthru
      _
    %v111 = vld [vmem:[#allocation9] sm:$0xff]
    %v112 = vld [vmem:[#allocation9 + $0x8] sm:$0xff]
    %v113 = vld [vmem:[%s3] sm:$0x1]
    %v114 = vld [vmem:[#allocation10] sm:$0xff]
    %v115 = vld [vmem:[#allocation10 + $0x8] sm:$0xff]
    %v116 = vld [vmem:[#allocation10 + $0x10] sm:$0xff]
    %v117 = vld [vmem:[#allocation10 + $0x18] sm:$0xff]
    %v118 = vld [vmem:[#allocation12] sm:$0xff]
    %v119 = vld [vmem:[#allocation12 + $0x8] sm:$0xff]
    %v120 = vld [vmem:[#allocation12 + $0x10] sm:$0xff]
    %v121 = vld [vmem:[#allocation12 + $0x18] sm:$0xff]
    %v122 = vld [vmem:[%s6] sm:$0x1]
    %v123 = vld [vmem:[#allocation14] sm:$0xff]
    %v124 = vld [vmem:[#allocation4] sm:$0xff]
    %v126 = vlaneseq
    %v127 = vshrl.u32 %v126, 7
    %v128 = vsub.s32 0, %v127
    %v129 = vrot.slane %v113, %v128
    %vm131 = vcmask 130048
    %v133 = vsel %vm131, %v124, 0
    %135 = vmatprep.subr.mxu0 0.0
    %136 = vmatpush1.msra.mxu0 0.0
    %137 = vmatprep.subr.mxu0 0.0
    %138 = vmatpush1.msra.mxu0 0.0
    %139 = vmatprep.subr.mxu0 0.0
    %140 = vmatpush1.msra.mxu0 0.0
    %141 = vmatprep.subr.mxu0 0.0
    %142 = vmatpush1.msra.mxu0 0.0
    %143 = vmatprep.subr.mxu0 0.0
    %144 = vmatpush1.msra.mxu0 0.0
    %145 = vmatprep.subr.mxu0 0.0
    %146 = vmatpush1.msra.mxu0 0.0
    %147 = vmatprep.subr.mxu0 0.0
    %148 = vmatpush1.msra.mxu0 0.0
    %149 = vmatprep.subr.mxu0 0.0
    %150 = vmatpush1.msra.mxu0 0.0
    %151 = vmatprep.subr.mxu0 0.0
    %152 = vmatpush1.msra.mxu0 0.0
    %153 = vmatprep.subr.mxu0 0.0
    %154 = vmatpush1.msra.mxu0 0.0
    %155 = vmatprep.subr.mxu0 0.0
    %156 = vmatpush1.msra.mxu0 0.0
    %157 = vmatprep.subr.mxu0 0.0
    %158 = vmatpush1.msra.mxu0 0.0
    %159 = vmatprep.subr.mxu0 0.0
    %160 = vmatpush1.msra.mxu0 0.0
    %161 = vmatprep.subr.mxu0 0.0
    %162 = vmatpush1.msra.mxu0 0.0
    %163 = vmatprep.subr.mxu0 0.0
    %164 = vmatpush1.msra.mxu0 %v112
    %165 = vmatprep.subr.mxu0 0.0
    %166 = vmatpush1.msra.mxu0 %v111
    %167 = vmatprep.subr.mxu0 0.0
    %168 = vmatpush2.msra.mxu0 0.0
    %169 = vmatprep.subr.mxu0 0.0
    %170 = vmatpush2.msra.mxu0 0.0
    %171 = vmatprep.subr.mxu0 0.0
    %172 = vmatpush2.msra.mxu0 0.0
    %173 = vmatprep.subr.mxu0 0.0
    %174 = vmatpush2.msra.mxu0 0.0
    %175 = vmatprep.subr.mxu0 0.0
    %176 = vmatpush2.msra.mxu0 0.0
    %177 = vmatprep.subr.mxu0 0.0
    %178 = vmatpush2.msra.mxu0 0.0
    %179 = vmatprep.subr.mxu0 0.0
    %180 = vmatpush2.msra.mxu0 0.0
    %181 = vmatprep.subr.mxu0 0.0
    %182 = vmatpush2.msra.mxu0 0.0
    %183 = vmatprep.subr.mxu0 0.0
    %184 = vmatpush2.msra.mxu0 0.0
    %185 = vmatprep.subr.mxu0 0.0
    %186 = vmatpush2.msra.mxu0 0.0
    %187 = vmatprep.subr.mxu0 0.0
    %188 = vmatpush2.msra.mxu0 0.0
    %189 = vmatprep.subr.mxu0 0.0
    %190 = vmatpush2.msra.mxu0 0.0
    %191 = vmatprep.subr.mxu0 0.0
    %192 = vmatpush2.msra.mxu0 0.0
    %193 = vmatprep.subr.mxu0 0.0
    %194 = vmatpush2.msra.mxu0 0.0
    %195 = vmatprep.subr.mxu0 0.0
    %196 = vmatpush2.msra.mxu0 0.0
    %197 = vmatprep.subr.mxu0 0.0
    %198 = vmatpush2.msra.mxu0 0.0
    %199 = vmatprep.mubr.f32.mxu0 0.0
    %200 = vmatmul.mubr.f32.gmra.mxu0 %v133
    %v201 = vpop.f32.mrf.mxu0
    %v202 = vadd.f32 %v129, %v201
    %v203 = vpop.f32.mrf.mxu0
    %204 = vdwg.mxu0
    %v205 = vmax.f32 %v202, 0.0
    %vm206 = vcmask 261120
    %v208 = vsel %vm206, %v123, 0
    %210 = vmatprep.subr.mxu0 0.0
    %211 = vmatpush1.msra.mxu0 0.0
    %212 = vmatprep.subr.mxu0 0.0
    %213 = vmatpush1.msra.mxu0 0.0
    %214 = vmatprep.subr.mxu0 0.0
    %215 = vmatpush1.msra.mxu0 0.0
    %216 = vmatprep.subr.mxu0 0.0
    %217 = vmatpush1.msra.mxu0 0.0
    %218 = vmatprep.subr.mxu0 0.0
    %219 = vmatpush1.msra.mxu0 0.0
    %220 = vmatprep.subr.mxu0 0.0
    %221 = vmatpush1.msra.mxu0 0.0
    %222 = vmatprep.subr.mxu0 0.0
    %223 = vmatpush1.msra.mxu0 0.0
    %224 = vmatprep.subr.mxu0 0.0
    %225 = vmatpush1.msra.mxu0 0.0
    %226 = vmatprep.subr.mxu0 0.0
    %227 = vmatpush1.msra.mxu0 0.0
    %228 = vmatprep.subr.mxu0 0.0
    %229 = vmatpush1.msra.mxu0 0.0
    %230 = vmatprep.subr.mxu0 0.0
    %231 = vmatpush1.msra.mxu0 0.0
    %232 = vmatprep.subr.mxu0 0.0
    %233 = vmatpush1.msra.mxu0 0.0
    %234 = vmatprep.subr.mxu0 0.0
    %235 = vmatpush1.msra.mxu0 %v121
    %236 = vmatprep.subr.mxu0 0.0
    %237 = vmatpush1.msra.mxu0 %v120
    %238 = vmatprep.subr.mxu0 0.0
    %239 = vmatpush1.msra.mxu0 %v119
    %240 = vmatprep.subr.mxu0 0.0
    %241 = vmatpush1.msra.mxu0 %v118
    %242 = vmatprep.subr.mxu0 0.0
    %243 = vmatpush2.msra.mxu0 0.0
    %244 = vmatprep.subr.mxu0 0.0
    %245 = vmatpush2.msra.mxu0 0.0
    %246 = vmatprep.subr.mxu0 0.0
    %247 = vmatpush2.msra.mxu0 0.0
    %248 = vmatprep.subr.mxu0 0.0
    %249 = vmatpush2.msra.mxu0 0.0
    %250 = vmatprep.subr.mxu0 0.0
    %251 = vmatpush2.msra.mxu0 0.0
    %252 = vmatprep.subr.mxu0 0.0
    %253 = vmatpush2.msra.mxu0 0.0
    %254 = vmatprep.subr.mxu0 0.0
    %255 = vmatpush2.msra.mxu0 0.0
    %256 = vmatprep.subr.mxu0 0.0
    %257 = vmatpush2.msra.mxu0 0.0
    %258 = vmatprep.subr.mxu0 0.0
    %259 = vmatpush2.msra.mxu0 0.0
    %260 = vmatprep.subr.mxu0 0.0
    %261 = vmatpush2.msra.mxu0 0.0
    %262 = vmatprep.subr.mxu0 0.0
    %263 = vmatpush2.msra.mxu0 0.0
    %264 = vmatprep.subr.mxu0 0.0
    %265 = vmatpush2.msra.mxu0 0.0
    %266 = vmatprep.subr.mxu0 0.0
    %267 = vmatpush2.msra.mxu0 0.0
    %268 = vmatprep.subr.mxu0 0.0
    %269 = vmatpush2.msra.mxu0 0.0
    %270 = vmatprep.subr.mxu0 0.0
    %271 = vmatpush2.msra.mxu0 0.0
    %272 = vmatprep.subr.mxu0 0.0
    %273 = vmatpush2.msra.mxu0 0.0
    %274 = vmatprep.mubr.f32.mxu0 0.0
    %275 = vmatmul.mubr.f32.gmra.mxu0 %v208
    %v276 = vpop.f32.mrf.mxu0
    %v277 = vadd.f32 0.0, %v276
    %v278 = vpop.f32.mrf.mxu0
    %279 = vdwg.mxu0
    %v281 = vsel %vm206, %v205, 0
    %283 = vmatprep.subr.mxu0 0.0
    %284 = vmatpush1.msra.mxu0 0.0
    %285 = vmatprep.subr.mxu0 0.0
    %286 = vmatpush1.msra.mxu0 0.0
    %287 = vmatprep.subr.mxu0 0.0
    %288 = vmatpush1.msra.mxu0 0.0
    %289 = vmatprep.subr.mxu0 0.0
    %290 = vmatpush1.msra.mxu0 0.0
    %291 = vmatprep.subr.mxu0 0.0
    %292 = vmatpush1.msra.mxu0 0.0
    %293 = vmatprep.subr.mxu0 0.0
    %294 = vmatpush1.msra.mxu0 0.0
    %295 = vmatprep.subr.mxu0 0.0
    %296 = vmatpush1.msra.mxu0 0.0
    %297 = vmatprep.subr.mxu0 0.0
    %298 = vmatpush1.msra.mxu0 0.0
    %299 = vmatprep.subr.mxu0 0.0
    %300 = vmatpush1.msra.mxu0 0.0
    %301 = vmatprep.subr.mxu0 0.0
    %302 = vmatpush1.msra.mxu0 0.0
    %303 = vmatprep.subr.mxu0 0.0
    %304 = vmatpush1.msra.mxu0 0.0
    %305 = vmatprep.subr.mxu0 0.0
    %306 = vmatpush1.msra.mxu0 0.0
    %307 = vmatprep.subr.mxu0 0.0
    %308 = vmatpush1.msra.mxu0 %v117
    %309 = vmatprep.subr.mxu0 0.0
    %310 = vmatpush1.msra.mxu0 %v116
    %311 = vmatprep.subr.mxu0 0.0
    %312 = vmatpush1.msra.mxu0 %v115
    %313 = vmatprep.subr.mxu0 0.0
    %314 = vmatpush1.msra.mxu0 %v114
    %315 = vmatprep.subr.mxu0 0.0
    %316 = vmatpush2.msra.mxu0 0.0
    %317 = vmatprep.subr.mxu0 0.0
    %318 = vmatpush2.msra.mxu0 0.0
    %319 = vmatprep.subr.mxu0 0.0
    %320 = vmatpush2.msra.mxu0 0.0
    %321 = vmatprep.subr.mxu0 0.0
    %322 = vmatpush2.msra.mxu0 0.0
    %323 = vmatprep.subr.mxu0 0.0
    %324 = vmatpush2.msra.mxu0 0.0
    %325 = vmatprep.subr.mxu0 0.0
    %326 = vmatpush2.msra.mxu0 0.0
    %327 = vmatprep.subr.mxu0 0.0
    %328 = vmatpush2.msra.mxu0 0.0
    %329 = vmatprep.subr.mxu0 0.0
    %330 = vmatpush2.msra.mxu0 0.0
    %331 = vmatprep.subr.mxu0 0.0
    %332 = vmatpush2.msra.mxu0 0.0
    %333 = vmatprep.subr.mxu0 0.0
    %334 = vmatpush2.msra.mxu0 0.0
    %335 = vmatprep.subr.mxu0 0.0
    %336 = vmatpush2.msra.mxu0 0.0
    %337 = vmatprep.subr.mxu0 0.0
    %338 = vmatpush2.msra.mxu0 0.0
    %339 = vmatprep.subr.mxu0 0.0
    %340 = vmatpush2.msra.mxu0 0.0
    %341 = vmatprep.subr.mxu0 0.0
    %342 = vmatpush2.msra.mxu0 0.0
    %343 = vmatprep.subr.mxu0 0.0
    %344 = vmatpush2.msra.mxu0 0.0
    %345 = vmatprep.subr.mxu0 0.0
    %346 = vmatpush2.msra.mxu0 0.0
    %347 = vmatprep.mubr.f32.mxu0 0.0
    %348 = vmatmul.mubr.f32.gmra.mxu0 %v281
    %v349 = vpop.f32.mrf.mxu0
    %v350 = vadd.f32 %v277, %v349
    %v351 = vpop.f32.mrf.mxu0
    %352 = vdwg.mxu0
    %v354 = vlaneseq
    %v355 = vshrl.u32 %v354, 7
    %v356 = vsub.s32 0, %v355
    %v357 = vrot.slane %v122, %v356
    %v359 = vadd.f32 %v350, %v357
    %v360 = vxor.u32 %v359, 2147483648
    %v361 = vmul.f32 %v360, 1.442695
    %v362 = vpow.pop %v361
    %v363 = vadd.f32 %v362, 1.0
    %v364 = vrcp.pop %v363
    %v365 = vmul.f32 1.0, %v364
    %367 = vrot.lane.b32.xlu0 %v359, 32
    %v368 = vpop.permute.xlu0 %367
    %v370 = vmul.f32 %v365, %v368
    %372 = vrot.lane.b32.xlu0 %v370, 64
    %v373 = vpop.permute.xlu0 %372
    %v375 = vadd.f32 %v359, %v373
    %v376 = vtanh.pop %v375
    %v377 = vsub.f32 1.0, %v365
    %379 = vrot.lane.b32.xlu0 %v376, 96
    %v380 = vpop.permute.xlu0 %379
    %v382 = vmul.f32 %v377, %v380
    %383 = vrot.lane.b32.xlu0 %v123, 32
    %v384 = vpop.permute.xlu0 %383
    %v386 = vmul.f32 %v365, %v384
    %v387 = vadd.f32 %v382, %v386
    %389 = vrot.lane.b32.xlu0 %v387, 96
    %v390 = vpop.permute.xlu0 %389
    %392 = vst.msk [vmem:[#allocation2] sm:$0xff] %vm206, %v390
    %s393 = scalar_lea.vmem [#allocation4], 8
    %v394 = vld [vmem:[%s393] sm:$0xff]
    %v396 = vsel %vm131, %v394, 0
    %398 = vmatprep.subr.mxu0 0.0
    %399 = vmatpush1.msra.mxu0 0.0
    %400 = vmatprep.subr.mxu0 0.0
    %401 = vmatpush1.msra.mxu0 0.0
    %402 = vmatprep.subr.mxu0 0.0
    %403 = vmatpush1.msra.mxu0 0.0
    %404 = vmatprep.subr.mxu0 0.0
    %405 = vmatpush1.msra.mxu0 0.0
    %406 = vmatprep.subr.mxu0 0.0
    %407 = vmatpush1.msra.mxu0 0.0
    %408 = vmatprep.subr.mxu0 0.0
    %409 = vmatpush1.msra.mxu0 0.0
    %410 = vmatprep.subr.mxu0 0.0
    %411 = vmatpush1.msra.mxu0 0.0
    %412 = vmatprep.subr.mxu0 0.0
    %413 = vmatpush1.msra.mxu0 0.0
    %414 = vmatprep.subr.mxu0 0.0
    %415 = vmatpush1.msra.mxu0 0.0
    %416 = vmatprep.subr.mxu0 0.0
    %417 = vmatpush1.msra.mxu0 0.0
    %418 = vmatprep.subr.mxu0 0.0
    %419 = vmatpush1.msra.mxu0 0.0
    %420 = vmatprep.subr.mxu0 0.0
    %421 = vmatpush1.msra.mxu0 0.0
    %422 = vmatprep.subr.mxu0 0.0
    %423 = vmatpush1.msra.mxu0 0.0
    %424 = vmatprep.subr.mxu0 0.0
    %425 = vmatpush1.msra.mxu0 0.0
    %426 = vmatprep.subr.mxu0 0.0
    %427 = vmatpush1.msra.mxu0 %v112
    %428 = vmatprep.subr.mxu0 0.0
    %429 = vmatpush1.msra.mxu0 %v111
    %430 = vmatprep.subr.mxu0 0.0
    %431 = vmatpush2.msra.mxu0 0.0
    %432 = vmatprep.subr.mxu0 0.0
    %433 = vmatpush2.msra.mxu0 0.0
    %434 = vmatprep.subr.mxu0 0.0
    %435 = vmatpush2.msra.mxu0 0.0
    %436 = vmatprep.subr.mxu0 0.0
    %437 = vmatpush2.msra.mxu0 0.0
    %438 = vmatprep.subr.mxu0 0.0
    %439 = vmatpush2.msra.mxu0 0.0
    %440 = vmatprep.subr.mxu0 0.0
    %441 = vmatpush2.msra.mxu0 0.0
    %442 = vmatprep.subr.mxu0 0.0
    %443 = vmatpush2.msra.mxu0 0.0
    %444 = vmatprep.subr.mxu0 0.0
    %445 = vmatpush2.msra.mxu0 0.0
    %446 = vmatprep.subr.mxu0 0.0
    %447 = vmatpush2.msra.mxu0 0.0
    %448 = vmatprep.subr.mxu0 0.0
    %449 = vmatpush2.msra.mxu0 0.0
    %450 = vmatprep.subr.mxu0 0.0
    %451 = vmatpush2.msra.mxu0 0.0
    %452 = vmatprep.subr.mxu0 0.0
    %453 = vmatpush2.msra.mxu0 0.0
    %454 = vmatprep.subr.mxu0 0.0
    %455 = vmatpush2.msra.mxu0 0.0
    %456 = vmatprep.subr.mxu0 0.0
    %457 = vmatpush2.msra.mxu0 0.0
    %458 = vmatprep.subr.mxu0 0.0
    %459 = vmatpush2.msra.mxu0 0.0
    %460 = vmatprep.subr.mxu0 0.0
    %461 = vmatpush2.msra.mxu0 0.0
    %462 = vmatprep.mubr.f32.mxu0 0.0
    %463 = vmatmul.mubr.f32.gmra.mxu0 %v396
    %v464 = vpop.f32.mrf.mxu0
    %v465 = vadd.f32 %v129, %v464
    %v466 = vpop.f32.mrf.mxu0
    %467 = vdwg.mxu0
    %v468 = vmax.f32 %v465, 0.0
    %v469 = vsel %vm206, %v390, 0
    %471 = vmatprep.subr.mxu0 0.0
    %472 = vmatpush1.msra.mxu0 0.0
    %473 = vmatprep.subr.mxu0 0.0
    %474 = vmatpush1.msra.mxu0 0.0
    %475 = vmatprep.subr.mxu0 0.0
    %476 = vmatpush1.msra.mxu0 0.0
    %477 = vmatprep.subr.mxu0 0.0
    %478 = vmatpush1.msra.mxu0 0.0
    %479 = vmatprep.subr.mxu0 0.0
    %480 = vmatpush1.msra.mxu0 0.0
    %481 = vmatprep.subr.mxu0 0.0
    %482 = vmatpush1.msra.mxu0 0.0
    %483 = vmatprep.subr.mxu0 0.0
    %484 = vmatpush1.msra.mxu0 0.0
    %485 = vmatprep.subr.mxu0 0.0
    %486 = vmatpush1.msra.mxu0 0.0
    %487 = vmatprep.subr.mxu0 0.0
    %488 = vmatpush1.msra.mxu0 0.0
    %489 = vmatprep.subr.mxu0 0.0
    %490 = vmatpush1.msra.mxu0 0.0
    %491 = vmatprep.subr.mxu0 0.0
    %492 = vmatpush1.msra.mxu0 0.0
    %493 = vmatprep.subr.mxu0 0.0
    %494 = vmatpush1.msra.mxu0 0.0
    %495 = vmatprep.subr.mxu0 0.0
    %496 = vmatpush1.msra.mxu0 %v121
    %497 = vmatprep.subr.mxu0 0.0
    %498 = vmatpush1.msra.mxu0 %v120
    %499 = vmatprep.subr.mxu0 0.0
    %500 = vmatpush1.msra.mxu0 %v119
    %501 = vmatprep.subr.mxu0 0.0
    %502 = vmatpush1.msra.mxu0 %v118
    %503 = vmatprep.subr.mxu0 0.0
    %504 = vmatpush2.msra.mxu0 0.0
    %505 = vmatprep.subr.mxu0 0.0
    %506 = vmatpush2.msra.mxu0 0.0
    %507 = vmatprep.subr.mxu0 0.0
    %508 = vmatpush2.msra.mxu0 0.0
    %509 = vmatprep.subr.mxu0 0.0
    %510 = vmatpush2.msra.mxu0 0.0
    %511 = vmatprep.subr.mxu0 0.0
    %512 = vmatpush2.msra.mxu0 0.0
    %513 = vmatprep.subr.mxu0 0.0
    %514 = vmatpush2.msra.mxu0 0.0
    %515 = vmatprep.subr.mxu0 0.0
    %516 = vmatpush2.msra.mxu0 0.0
    %517 = vmatprep.subr.mxu0 0.0
    %518 = vmatpush2.msra.mxu0 0.0
    %519 = vmatprep.subr.mxu0 0.0
    %520 = vmatpush2.msra.mxu0 0.0
    %521 = vmatprep.subr.mxu0 0.0
    %522 = vmatpush2.msra.mxu0 0.0
    %523 = vmatprep.subr.mxu0 0.0
    %524 = vmatpush2.msra.mxu0 0.0
    %525 = vmatprep.subr.mxu0 0.0
    %526 = vmatpush2.msra.mxu0 0.0
    %527 = vmatprep.subr.mxu0 0.0
    %528 = vmatpush2.msra.mxu0 0.0
    %529 = vmatprep.subr.mxu0 0.0
    %530 = vmatpush2.msra.mxu0 0.0
    %531 = vmatprep.subr.mxu0 0.0
    %532 = vmatpush2.msra.mxu0 0.0
    %533 = vmatprep.subr.mxu0 0.0
    %534 = vmatpush2.msra.mxu0 0.0
    %535 = vmatprep.mubr.f32.mxu0 0.0
    %536 = vmatmul.mubr.f32.gmra.mxu0 %v469
    %v537 = vpop.f32.mrf.mxu0
    %v538 = vadd.f32 0.0, %v537
    %v539 = vpop.f32.mrf.mxu0
    %540 = vdwg.mxu0
    %v542 = vsel %vm206, %v468, 0
    %544 = vmatprep.subr.mxu0 0.0
    %545 = vmatpush1.msra.mxu0 0.0
    %546 = vmatprep.subr.mxu0 0.0
    %547 = vmatpush1.msra.mxu0 0.0
    %548 = vmatprep.subr.mxu0 0.0
    %549 = vmatpush1.msra.mxu0 0.0
    %550 = vmatprep.subr.mxu0 0.0
    %551 = vmatpush1.msra.mxu0 0.0
    %552 = vmatprep.subr.mxu0 0.0
    %553 = vmatpush1.msra.mxu0 0.0
    %554 = vmatprep.subr.mxu0 0.0
    %555 = vmatpush1.msra.mxu0 0.0
    %556 = vmatprep.subr.mxu0 0.0
    %557 = vmatpush1.msra.mxu0 0.0
    %558 = vmatprep.subr.mxu0 0.0
    %559 = vmatpush1.msra.mxu0 0.0
    %560 = vmatprep.subr.mxu0 0.0
    %561 = vmatpush1.msra.mxu0 0.0
    %562 = vmatprep.subr.mxu0 0.0
    %563 = vmatpush1.msra.mxu0 0.0
    %564 = vmatprep.subr.mxu0 0.0
    %565 = vmatpush1.msra.mxu0 0.0
    %566 = vmatprep.subr.mxu0 0.0
    %567 = vmatpush1.msra.mxu0 0.0
    %568 = vmatprep.subr.mxu0 0.0
    %569 = vmatpush1.msra.mxu0 %v117
    %570 = vmatprep.subr.mxu0 0.0
    %571 = vmatpush1.msra.mxu0 %v116
    %572 = vmatprep.subr.mxu0 0.0
    %573 = vmatpush1.msra.mxu0 %v115
    %574 = vmatprep.subr.mxu0 0.0
    %575 = vmatpush1.msra.mxu0 %v114
    %576 = vmatprep.subr.mxu0 0.0
    %577 = vmatpush2.msra.mxu0 0.0
    %578 = vmatprep.subr.mxu0 0.0
    %579 = vmatpush2.msra.mxu0 0.0
    %580 = vmatprep.subr.mxu0 0.0
    %581 = vmatpush2.msra.mxu0 0.0
    %582 = vmatprep.subr.mxu0 0.0
    %583 = vmatpush2.msra.mxu0 0.0
    %584 = vmatprep.subr.mxu0 0.0
    %585 = vmatpush2.msra.mxu0 0.0
    %586 = vmatprep.subr.mxu0 0.0
    %587 = vmatpush2.msra.mxu0 0.0
    %588 = vmatprep.subr.mxu0 0.0
    %589 = vmatpush2.msra.mxu0 0.0
    %590 = vmatprep.subr.mxu0 0.0
    %591 = vmatpush2.msra.mxu0 0.0
    %592 = vmatprep.subr.mxu0 0.0
    %593 = vmatpush2.msra.mxu0 0.0
    %594 = vmatprep.subr.mxu0 0.0
    %595 = vmatpush2.msra.mxu0 0.0
    %596 = vmatprep.subr.mxu0 0.0
    %597 = vmatpush2.msra.mxu0 0.0
    %598 = vmatprep.subr.mxu0 0.0
    %599 = vmatpush2.msra.mxu0 0.0
    %600 = vmatprep.subr.mxu0 0.0
    %601 = vmatpush2.msra.mxu0 0.0
    %602 = vmatprep.subr.mxu0 0.0
    %603 = vmatpush2.msra.mxu0 0.0
    %604 = vmatprep.subr.mxu0 0.0
    %605 = vmatpush2.msra.mxu0 0.0
    %606 = vmatprep.subr.mxu0 0.0
    %607 = vmatpush2.msra.mxu0 0.0
    %608 = vmatprep.mubr.f32.mxu0 0.0
    %609 = vmatmul.mubr.f32.gmra.mxu0 %v542
    %v610 = vpop.f32.mrf.mxu0
    %v611 = vadd.f32 %v538, %v610
    %v612 = vpop.f32.mrf.mxu0
    %613 = vdwg.mxu0
    %v614 = vadd.f32 %v611, %v357
    %v615 = vxor.u32 %v614, 2147483648
    %v616 = vmul.f32 %v615, 1.442695
    %v617 = vpow.pop %v616
    %v618 = vadd.f32 %v617, 1.0
    %v619 = vrcp.pop %v618
    %v620 = vmul.f32 1.0, %v619
    %622 = vrot.lane.b32.xlu0 %v614, 32
    %v623 = vpop.permute.xlu0 %622
    %v625 = vmul.f32 %v620, %v623
    %627 = vrot.lane.b32.xlu0 %v625, 64
    %v628 = vpop.permute.xlu0 %627
    %v630 = vadd.f32 %v614, %v628
    %v631 = vtanh.pop %v630
    %v632 = vsub.f32 1.0, %v620
    %634 = vrot.lane.b32.xlu0 %v631, 96
    %v635 = vpop.permute.xlu0 %634
    %v637 = vmul.f32 %v632, %v635
    %v638 = vmul.f32 %v620, %v387
    %v639 = vadd.f32 %v637, %v638
    %641 = vrot.lane.b32.xlu0 %v639, 96
    %v642 = vpop.permute.xlu0 %641
    %s644 = scalar_lea.vmem [#allocation2], 8
    %645 = vst.msk [vmem:[%s644] sm:$0xff] %vm206, %v642
    %s646 = scalar_lea.vmem [#allocation4], 16
    %v647 = vld [vmem:[%s646] sm:$0xff]
    %v649 = vsel %vm131, %v647, 0
    %651 = vmatprep.subr.mxu0 0.0
    %652 = vmatpush1.msra.mxu0 0.0
    %653 = vmatprep.subr.mxu0 0.0
    %654 = vmatpush1.msra.mxu0 0.0
    %655 = vmatprep.subr.mxu0 0.0
    %656 = vmatpush1.msra.mxu0 0.0
    %657 = vmatprep.subr.mxu0 0.0
    %658 = vmatpush1.msra.mxu0 0.0
    %659 = vmatprep.subr.mxu0 0.0
    %660 = vmatpush1.msra.mxu0 0.0
    %661 = vmatprep.subr.mxu0 0.0
    %662 = vmatpush1.msra.mxu0 0.0
    %663 = vmatprep.subr.mxu0 0.0
    %664 = vmatpush1.msra.mxu0 0.0
    %665 = vmatprep.subr.mxu0 0.0
    %666 = vmatpush1.msra.mxu0 0.0
    %667 = vmatprep.subr.mxu0 0.0
    %668 = vmatpush1.msra.mxu0 0.0
    %669 = vmatprep.subr.mxu0 0.0
    %670 = vmatpush1.msra.mxu0 0.0
    %671 = vmatprep.subr.mxu0 0.0
    %672 = vmatpush1.msra.mxu0 0.0
    %673 = vmatprep.subr.mxu0 0.0
    %674 = vmatpush1.msra.mxu0 0.0
    %675 = vmatprep.subr.mxu0 0.0
    %676 = vmatpush1.msra.mxu0 0.0
    %677 = vmatprep.subr.mxu0 0.0
    %678 = vmatpush1.msra.mxu0 0.0
    %679 = vmatprep.subr.mxu0 0.0
    %680 = vmatpush1.msra.mxu0 %v112
    %681 = vmatprep.subr.mxu0 0.0
    %682 = vmatpush1.msra.mxu0 %v111
    %683 = vmatprep.subr.mxu0 0.0
    %684 = vmatpush2.msra.mxu0 0.0
    %685 = vmatprep.subr.mxu0 0.0
    %686 = vmatpush2.msra.mxu0 0.0
    %687 = vmatprep.subr.mxu0 0.0
    %688 = vmatpush2.msra.mxu0 0.0
    %689 = vmatprep.subr.mxu0 0.0
    %690 = vmatpush2.msra.mxu0 0.0
    %691 = vmatprep.subr.mxu0 0.0
    %692 = vmatpush2.msra.mxu0 0.0
    %693 = vmatprep.subr.mxu0 0.0
    %694 = vmatpush2.msra.mxu0 0.0
    %695 = vmatprep.subr.mxu0 0.0
    %696 = vmatpush2.msra.mxu0 0.0
    %697 = vmatprep.subr.mxu0 0.0
    %698 = vmatpush2.msra.mxu0 0.0
    %699 = vmatprep.subr.mxu0 0.0
    %700 = vmatpush2.msra.mxu0 0.0
    %701 = vmatprep.subr.mxu0 0.0
    %702 = vmatpush2.msra.mxu0 0.0
    %703 = vmatprep.subr.mxu0 0.0
    %704 = vmatpush2.msra.mxu0 0.0
    %705 = vmatprep.subr.mxu0 0.0
    %706 = vmatpush2.msra.mxu0 0.0
    %707 = vmatprep.subr.mxu0 0.0
    %708 = vmatpush2.msra.mxu0 0.0
    %709 = vmatprep.subr.mxu0 0.0
    %710 = vmatpush2.msra.mxu0 0.0
    %711 = vmatprep.subr.mxu0 0.0
    %712 = vmatpush2.msra.mxu0 0.0
    %713 = vmatprep.subr.mxu0 0.0
    %714 = vmatpush2.msra.mxu0 0.0
    %715 = vmatprep.mubr.f32.mxu0 0.0
    %716 = vmatmul.mubr.f32.gmra.mxu0 %v649
    %v717 = vpop.f32.mrf.mxu0
    %v718 = vadd.f32 %v129, %v717
    %v719 = vpop.f32.mrf.mxu0
    %720 = vdwg.mxu0
    %v721 = vmax.f32 %v718, 0.0
    %v722 = vsel %vm206, %v642, 0
    %724 = vmatprep.subr.mxu0 0.0
    %725 = vmatpush1.msra.mxu0 0.0
    %726 = vmatprep.subr.mxu0 0.0
    %727 = vmatpush1.msra.mxu0 0.0
    %728 = vmatprep.subr.mxu0 0.0
    %729 = vmatpush1.msra.mxu0 0.0
    %730 = vmatprep.subr.mxu0 0.0
    %731 = vmatpush1.msra.mxu0 0.0
    %732 = vmatprep.subr.mxu0 0.0
    %733 = vmatpush1.msra.mxu0 0.0
    %734 = vmatprep.subr.mxu0 0.0
    %735 = vmatpush1.msra.mxu0 0.0
    %736 = vmatprep.subr.mxu0 0.0
    %737 = vmatpush1.msra.mxu0 0.0
    %738 = vmatprep.subr.mxu0 0.0
    %739 = vmatpush1.msra.mxu0 0.0
    %740 = vmatprep.subr.mxu0 0.0
    %741 = vmatpush1.msra.mxu0 0.0
    %742 = vmatprep.subr.mxu0 0.0
    %743 = vmatpush1.msra.mxu0 0.0
    %744 = vmatprep.subr.mxu0 0.0
    %745 = vmatpush1.msra.mxu0 0.0
    %746 = vmatprep.subr.mxu0 0.0
    %747 = vmatpush1.msra.mxu0 0.0
    %748 = vmatprep.subr.mxu0 0.0
    %749 = vmatpush1.msra.mxu0 %v121
    %750 = vmatprep.subr.mxu0 0.0
    %751 = vmatpush1.msra.mxu0 %v120
    %752 = vmatprep.subr.mxu0 0.0
    %753 = vmatpush1.msra.mxu0 %v119
    %754 = vmatprep.subr.mxu0 0.0
    %755 = vmatpush1.msra.mxu0 %v118
    %756 = vmatprep.subr.mxu0 0.0
    %757 = vmatpush2.msra.mxu0 0.0
    %758 = vmatprep.subr.mxu0 0.0
    %759 = vmatpush2.msra.mxu0 0.0
    %760 = vmatprep.subr.mxu0 0.0
    %761 = vmatpush2.msra.mxu0 0.0
    %762 = vmatprep.subr.mxu0 0.0
    %763 = vmatpush2.msra.mxu0 0.0
    %764 = vmatprep.subr.mxu0 0.0
    %765 = vmatpush2.msra.mxu0 0.0
    %766 = vmatprep.subr.mxu0 0.0
    %767 = vmatpush2.msra.mxu0 0.0
    %768 = vmatprep.subr.mxu0 0.0
    %769 = vmatpush2.msra.mxu0 0.0
    %770 = vmatprep.subr.mxu0 0.0
    %771 = vmatpush2.msra.mxu0 0.0
    %772 = vmatprep.subr.mxu0 0.0
    %773 = vmatpush2.msra.mxu0 0.0
    %774 = vmatprep.subr.mxu0 0.0
    %775 = vmatpush2.msra.mxu0 0.0
    %776 = vmatprep.subr.mxu0 0.0
    %777 = vmatpush2.msra.mxu0 0.0
    %778 = vmatprep.subr.mxu0 0.0
    %779 = vmatpush2.msra.mxu0 0.0
    %780 = vmatprep.subr.mxu0 0.0
    %781 = vmatpush2.msra.mxu0 0.0
    %782 = vmatprep.subr.mxu0 0.0
    %783 = vmatpush2.msra.mxu0 0.0
    %784 = vmatprep.subr.mxu0 0.0
    %785 = vmatpush2.msra.mxu0 0.0
    %786 = vmatprep.subr.mxu0 0.0
    %787 = vmatpush2.msra.mxu0 0.0
    %788 = vmatprep.mubr.f32.mxu0 0.0
    %789 = vmatmul.mubr.f32.gmra.mxu0 %v722
    %v790 = vpop.f32.mrf.mxu0
    %v791 = vadd.f32 0.0, %v790
    %v792 = vpop.f32.mrf.mxu0
    %793 = vdwg.mxu0
    %v795 = vsel %vm206, %v721, 0
    %797 = vmatprep.subr.mxu0 0.0
    %798 = vmatpush1.msra.mxu0 0.0
    %799 = vmatprep.subr.mxu0 0.0
    %800 = vmatpush1.msra.mxu0 0.0
    %801 = vmatprep.subr.mxu0 0.0
    %802 = vmatpush1.msra.mxu0 0.0
    %803 = vmatprep.subr.mxu0 0.0
    %804 = vmatpush1.msra.mxu0 0.0
    %805 = vmatprep.subr.mxu0 0.0
    %806 = vmatpush1.msra.mxu0 0.0
    %807 = vmatprep.subr.mxu0 0.0
    %808 = vmatpush1.msra.mxu0 0.0
    %809 = vmatprep.subr.mxu0 0.0
    %810 = vmatpush1.msra.mxu0 0.0
    %811 = vmatprep.subr.mxu0 0.0
    %812 = vmatpush1.msra.mxu0 0.0
    %813 = vmatprep.subr.mxu0 0.0
    %814 = vmatpush1.msra.mxu0 0.0
    %815 = vmatprep.subr.mxu0 0.0
    %816 = vmatpush1.msra.mxu0 0.0
    %817 = vmatprep.subr.mxu0 0.0
    %818 = vmatpush1.msra.mxu0 0.0
    %819 = vmatprep.subr.mxu0 0.0
    %820 = vmatpush1.msra.mxu0 0.0
    %821 = vmatprep.subr.mxu0 0.0
    %822 = vmatpush1.msra.mxu0 %v117
    %823 = vmatprep.subr.mxu0 0.0
    %824 = vmatpush1.msra.mxu0 %v116
    %825 = vmatprep.subr.mxu0 0.0
    %826 = vmatpush1.msra.mxu0 %v115
    %827 = vmatprep.subr.mxu0 0.0
    %828 = vmatpush1.msra.mxu0 %v114
    %829 = vmatprep.subr.mxu0 0.0
    %830 = vmatpush2.msra.mxu0 0.0
    %831 = vmatprep.subr.mxu0 0.0
    %832 = vmatpush2.msra.mxu0 0.0
    %833 = vmatprep.subr.mxu0 0.0
    %834 = vmatpush2.msra.mxu0 0.0
    %835 = vmatprep.subr.mxu0 0.0
    %836 = vmatpush2.msra.mxu0 0.0
    %837 = vmatprep.subr.mxu0 0.0
    %838 = vmatpush2.msra.mxu0 0.0
    %839 = vmatprep.subr.mxu0 0.0
    %840 = vmatpush2.msra.mxu0 0.0
    %841 = vmatprep.subr.mxu0 0.0
    %842 = vmatpush2.msra.mxu0 0.0
    %843 = vmatprep.subr.mxu0 0.0
    %844 = vmatpush2.msra.mxu0 0.0
    %845 = vmatprep.subr.mxu0 0.0
    %846 = vmatpush2.msra.mxu0 0.0
    %847 = vmatprep.subr.mxu0 0.0
    %848 = vmatpush2.msra.mxu0 0.0
    %849 = vmatprep.subr.mxu0 0.0
    %850 = vmatpush2.msra.mxu0 0.0
    %851 = vmatprep.subr.mxu0 0.0
    %852 = vmatpush2.msra.mxu0 0.0
    %853 = vmatprep.subr.mxu0 0.0
    %854 = vmatpush2.msra.mxu0 0.0
    %855 = vmatprep.subr.mxu0 0.0
    %856 = vmatpush2.msra.mxu0 0.0
    %857 = vmatprep.subr.mxu0 0.0
    %858 = vmatpush2.msra.mxu0 0.0
    %859 = vmatprep.subr.mxu0 0.0
    %860 = vmatpush2.msra.mxu0 0.0
    %861 = vmatprep.mubr.f32.mxu0 0.0
    %862 = vmatmul.mubr.f32.gmra.mxu0 %v795
    %v863 = vpop.f32.mrf.mxu0
    %v864 = vadd.f32 %v791, %v863
    %v865 = vpop.f32.mrf.mxu0
    %866 = vdwg.mxu0
    %v867 = vadd.f32 %v864, %v357
    %v868 = vxor.u32 %v867, 2147483648
    %v869 = vmul.f32 %v868, 1.442695
    %v870 = vpow.pop %v869
    %v871 = vadd.f32 %v870, 1.0
    %v872 = vrcp.pop %v871
    %v873 = vmul.f32 1.0, %v872
    %875 = vrot.lane.b32.xlu0 %v867, 32
    %v876 = vpop.permute.xlu0 %875
    %v878 = vmul.f32 %v873, %v876
    %880 = vrot.lane.b32.xlu0 %v878, 64
    %v881 = vpop.permute.xlu0 %880
    %v883 = vadd.f32 %v867, %v881
    %v884 = vtanh.pop %v883
    %v885 = vsub.f32 1.0, %v873
    %887 = vrot.lane.b32.xlu0 %v884, 96
    %v888 = vpop.permute.xlu0 %887
    %v890 = vmul.f32 %v885, %v888
    %v891 = vmul.f32 %v873, %v639
    %v892 = vadd.f32 %v890, %v891
    %894 = vrot.lane.b32.xlu0 %v892, 96
    %v895 = vpop.permute.xlu0 %894
    %s897 = scalar_lea.vmem [#allocation2], 16
    %898 = vst.msk [vmem:[%s897] sm:$0xff] %vm206, %v895
    %s899 = scalar_lea.vmem [#allocation4], 24
    %v900 = vld [vmem:[%s899] sm:$0xff]
    %v902 = vsel %vm131, %v900, 0
    %904 = vmatprep.subr.mxu0 0.0
    %905 = vmatpush1.msra.mxu0 0.0
    %906 = vmatprep.subr.mxu0 0.0
    %907 = vmatpush1.msra.mxu0 0.0
    %908 = vmatprep.subr.mxu0 0.0
    %909 = vmatpush1.msra.mxu0 0.0
    %910 = vmatprep.subr.mxu0 0.0
    %911 = vmatpush1.msra.mxu0 0.0
    %912 = vmatprep.subr.mxu0 0.0
    %913 = vmatpush1.msra.mxu0 0.0
    %914 = vmatprep.subr.mxu0 0.0
    %915 = vmatpush1.msra.mxu0 0.0
    %916 = vmatprep.subr.mxu0 0.0
    %917 = vmatpush1.msra.mxu0 0.0
    %918 = vmatprep.subr.mxu0 0.0
    %919 = vmatpush1.msra.mxu0 0.0
    %920 = vmatprep.subr.mxu0 0.0
    %921 = vmatpush1.msra.mxu0 0.0
    %922 = vmatprep.subr.mxu0 0.0
    %923 = vmatpush1.msra.mxu0 0.0
    %924 = vmatprep.subr.mxu0 0.0
    %925 = vmatpush1.msra.mxu0 0.0
    %926 = vmatprep.subr.mxu0 0.0
    %927 = vmatpush1.msra.mxu0 0.0
    %928 = vmatprep.subr.mxu0 0.0
    %929 = vmatpush1.msra.mxu0 0.0
    %930 = vmatprep.subr.mxu0 0.0
    %931 = vmatpush1.msra.mxu0 0.0
    %932 = vmatprep.subr.mxu0 0.0
    %933 = vmatpush1.msra.mxu0 %v112
    %934 = vmatprep.subr.mxu0 0.0
    %935 = vmatpush1.msra.mxu0 %v111
    %936 = vmatprep.subr.mxu0 0.0
    %937 = vmatpush2.msra.mxu0 0.0
    %938 = vmatprep.subr.mxu0 0.0
    %939 = vmatpush2.msra.mxu0 0.0
    %940 = vmatprep.subr.mxu0 0.0
    %941 = vmatpush2.msra.mxu0 0.0
    %942 = vmatprep.subr.mxu0 0.0
    %943 = vmatpush2.msra.mxu0 0.0
    %944 = vmatprep.subr.mxu0 0.0
    %945 = vmatpush2.msra.mxu0 0.0
    %946 = vmatprep.subr.mxu0 0.0
    %947 = vmatpush2.msra.mxu0 0.0
    %948 = vmatprep.subr.mxu0 0.0
    %949 = vmatpush2.msra.mxu0 0.0
    %950 = vmatprep.subr.mxu0 0.0
    %951 = vmatpush2.msra.mxu0 0.0
    %952 = vmatprep.subr.mxu0 0.0
    %953 = vmatpush2.msra.mxu0 0.0
    %954 = vmatprep.subr.mxu0 0.0
    %955 = vmatpush2.msra.mxu0 0.0
    %956 = vmatprep.subr.mxu0 0.0
    %957 = vmatpush2.msra.mxu0 0.0
    %958 = vmatprep.subr.mxu0 0.0
    %959 = vmatpush2.msra.mxu0 0.0
    %960 = vmatprep.subr.mxu0 0.0
    %961 = vmatpush2.msra.mxu0 0.0
    %962 = vmatprep.subr.mxu0 0.0
    %963 = vmatpush2.msra.mxu0 0.0
    %964 = vmatprep.subr.mxu0 0.0
    %965 = vmatpush2.msra.mxu0 0.0
    %966 = vmatprep.subr.mxu0 0.0
    %967 = vmatpush2.msra.mxu0 0.0
    %968 = vmatprep.mubr.f32.mxu0 0.0
    %969 = vmatmul.mubr.f32.gmra.mxu0 %v902
    %v970 = vpop.f32.mrf.mxu0
    %v971 = vadd.f32 %v129, %v970
    %v972 = vpop.f32.mrf.mxu0
    %973 = vdwg.mxu0
    %v974 = vmax.f32 %v971, 0.0
    %v975 = vsel %vm206, %v895, 0
    %977 = vmatprep.subr.mxu0 0.0
    %978 = vmatpush1.msra.mxu0 0.0
    %979 = vmatprep.subr.mxu0 0.0
    %980 = vmatpush1.msra.mxu0 0.0
    %981 = vmatprep.subr.mxu0 0.0
    %982 = vmatpush1.msra.mxu0 0.0
    %983 = vmatprep.subr.mxu0 0.0
    %984 = vmatpush1.msra.mxu0 0.0
    %985 = vmatprep.subr.mxu0 0.0
    %986 = vmatpush1.msra.mxu0 0.0
    %987 = vmatprep.subr.mxu0 0.0
    %988 = vmatpush1.msra.mxu0 0.0
    %989 = vmatprep.subr.mxu0 0.0
    %990 = vmatpush1.msra.mxu0 0.0
    %991 = vmatprep.subr.mxu0 0.0
    %992 = vmatpush1.msra.mxu0 0.0
    %993 = vmatprep.subr.mxu0 0.0
    %994 = vmatpush1.msra.mxu0 0.0
    %995 = vmatprep.subr.mxu0 0.0
    %996 = vmatpush1.msra.mxu0 0.0
    %997 = vmatprep.subr.mxu0 0.0
    %998 = vmatpush1.msra.mxu0 0.0
    %999 = vmatprep.subr.mxu0 0.0
    %1000 = vmatpush1.msra.mxu0 0.0
    %1001 = vmatprep.subr.mxu0 0.0
    %1002 = vmatpush1.msra.mxu0 %v121
    %1003 = vmatprep.subr.mxu0 0.0
    %1004 = vmatpush1.msra.mxu0 %v120
    %1005 = vmatprep.subr.mxu0 0.0
    %1006 = vmatpush1.msra.mxu0 %v119
    %1007 = vmatprep.subr.mxu0 0.0
    %1008 = vmatpush1.msra.mxu0 %v118
    %1009 = vmatprep.subr.mxu0 0.0
    %1010 = vmatpush2.msra.mxu0 0.0
    %1011 = vmatprep.subr.mxu0 0.0
    %1012 = vmatpush2.msra.mxu0 0.0
    %1013 = vmatprep.subr.mxu0 0.0
    %1014 = vmatpush2.msra.mxu0 0.0
    %1015 = vmatprep.subr.mxu0 0.0
    %1016 = vmatpush2.msra.mxu0 0.0
    %1017 = vmatprep.subr.mxu0 0.0
    %1018 = vmatpush2.msra.mxu0 0.0
    %1019 = vmatprep.subr.mxu0 0.0
    %1020 = vmatpush2.msra.mxu0 0.0
    %1021 = vmatprep.subr.mxu0 0.0
    %1022 = vmatpush2.msra.mxu0 0.0
    %1023 = vmatprep.subr.mxu0 0.0
    %1024 = vmatpush2.msra.mxu0 0.0
    %1025 = vmatprep.subr.mxu0 0.0
    %1026 = vmatpush2.msra.mxu0 0.0
    %1027 = vmatprep.subr.mxu0 0.0
    %1028 = vmatpush2.msra.mxu0 0.0
    %1029 = vmatprep.subr.mxu0 0.0
    %1030 = vmatpush2.msra.mxu0 0.0
    %1031 = vmatprep.subr.mxu0 0.0
    %1032 = vmatpush2.msra.mxu0 0.0
    %1033 = vmatprep.subr.mxu0 0.0
    %1034 = vmatpush2.msra.mxu0 0.0
    %1035 = vmatprep.subr.mxu0 0.0
    %1036 = vmatpush2.msra.mxu0 0.0
    %1037 = vmatprep.subr.mxu0 0.0
    %1038 = vmatpush2.msra.mxu0 0.0
    %1039 = vmatprep.subr.mxu0 0.0
    %1040 = vmatpush2.msra.mxu0 0.0
    %1041 = vmatprep.mubr.f32.mxu0 0.0
    %1042 = vmatmul.mubr.f32.gmra.mxu0 %v975
    %v1043 = vpop.f32.mrf.mxu0
    %v1044 = vadd.f32 0.0, %v1043
    %v1045 = vpop.f32.mrf.mxu0
    %1046 = vdwg.mxu0
    %v1048 = vsel %vm206, %v974, 0
    %1050 = vmatprep.subr.mxu0 0.0
    %1051 = vmatpush1.msra.mxu0 0.0
    %1052 = vmatprep.subr.mxu0 0.0
    %1053 = vmatpush1.msra.mxu0 0.0
    %1054 = vmatprep.subr.mxu0 0.0
    %1055 = vmatpush1.msra.mxu0 0.0
    %1056 = vmatprep.subr.mxu0 0.0
    %1057 = vmatpush1.msra.mxu0 0.0
    %1058 = vmatprep.subr.mxu0 0.0
    %1059 = vmatpush1.msra.mxu0 0.0
    %1060 = vmatprep.subr.mxu0 0.0
    %1061 = vmatpush1.msra.mxu0 0.0
    %1062 = vmatprep.subr.mxu0 0.0
    %1063 = vmatpush1.msra.mxu0 0.0
    %1064 = vmatprep.subr.mxu0 0.0
    %1065 = vmatpush1.msra.mxu0 0.0
    %1066 = vmatprep.subr.mxu0 0.0
    %1067 = vmatpush1.msra.mxu0 0.0
    %1068 = vmatprep.subr.mxu0 0.0
    %1069 = vmatpush1.msra.mxu0 0.0
    %1070 = vmatprep.subr.mxu0 0.0
    %1071 = vmatpush1.msra.mxu0 0.0
    %1072 = vmatprep.subr.mxu0 0.0
    %1073 = vmatpush1.msra.mxu0 0.0
    %1074 = vmatprep.subr.mxu0 0.0
    %1075 = vmatpush1.msra.mxu0 %v117
    %1076 = vmatprep.subr.mxu0 0.0
    %1077 = vmatpush1.msra.mxu0 %v116
    %1078 = vmatprep.subr.mxu0 0.0
    %1079 = vmatpush1.msra.mxu0 %v115
    %1080 = vmatprep.subr.mxu0 0.0
    %1081 = vmatpush1.msra.mxu0 %v114
    %1082 = vmatprep.subr.mxu0 0.0
    %1083 = vmatpush2.msra.mxu0 0.0
    %1084 = vmatprep.subr.mxu0 0.0
    %1085 = vmatpush2.msra.mxu0 0.0
    %1086 = vmatprep.subr.mxu0 0.0
    %1087 = vmatpush2.msra.mxu0 0.0
    %1088 = vmatprep.subr.mxu0 0.0
    %1089 = vmatpush2.msra.mxu0 0.0
    %1090 = vmatprep.subr.mxu0 0.0
    %1091 = vmatpush2.msra.mxu0 0.0
    %1092 = vmatprep.subr.mxu0 0.0
    %1093 = vmatpush2.msra.mxu0 0.0
    %1094 = vmatprep.subr.mxu0 0.0
    %1095 = vmatpush2.msra.mxu0 0.0
    %1096 = vmatprep.subr.mxu0 0.0
    %1097 = vmatpush2.msra.mxu0 0.0
    %1098 = vmatprep.subr.mxu0 0.0
    %1099 = vmatpush2.msra.mxu0 0.0
    %1100 = vmatprep.subr.mxu0 0.0
    %1101 = vmatpush2.msra.mxu0 0.0
    %1102 = vmatprep.subr.mxu0 0.0
    %1103 = vmatpush2.msra.mxu0 0.0
    %1104 = vmatprep.subr.mxu0 0.0
    %1105 = vmatpush2.msra.mxu0 0.0
    %1106 = vmatprep.subr.mxu0 0.0
    %1107 = vmatpush2.msra.mxu0 0.0
    %1108 = vmatprep.subr.mxu0 0.0
    %1109 = vmatpush2.msra.mxu0 0.0
    %1110 = vmatprep.subr.mxu0 0.0
    %1111 = vmatpush2.msra.mxu0 0.0
    %1112 = vmatprep.subr.mxu0 0.0
    %1113 = vmatpush2.msra.mxu0 0.0
    %1114 = vmatprep.mubr.f32.mxu0 0.0
    %1115 = vmatmul.mubr.f32.gmra.mxu0 %v1048
    %v1116 = vpop.f32.mrf.mxu0
    %v1117 = vadd.f32 %v1044, %v1116
    %v1118 = vpop.f32.mrf.mxu0
    %1119 = vdwg.mxu0
    %v1120 = vadd.f32 %v1117, %v357
    %v1121 = vxor.u32 %v1120, 2147483648
    %v1122 = vmul.f32 %v1121, 1.442695
    %v1123 = vpow.pop %v1122
    %v1124 = vadd.f32 %v1123, 1.0
    %v1125 = vrcp.pop %v1124
    %v1126 = vmul.f32 1.0, %v1125
    %1128 = vrot.lane.b32.xlu0 %v1120, 32
    %v1129 = vpop.permute.xlu0 %1128
    %v1131 = vmul.f32 %v1126, %v1129
    %1133 = vrot.lane.b32.xlu0 %v1131, 64
    %v1134 = vpop.permute.xlu0 %1133
    %v1136 = vadd.f32 %v1120, %v1134
    %v1137 = vtanh.pop %v1136
    %v1138 = vsub.f32 1.0, %v1126
    %1140 = vrot.lane.b32.xlu0 %v1137, 96
    %v1141 = vpop.permute.xlu0 %1140
    %v1143 = vmul.f32 %v1138, %v1141
    %v1144 = vmul.f32 %v1126, %v892
    %v1145 = vadd.f32 %v1143, %v1144
    %1147 = vrot.lane.b32.xlu0 %v1145, 96
    %v1148 = vpop.permute.xlu0 %1147
    %s1150 = scalar_lea.vmem [#allocation2], 24
    %1151 = vst.msk [vmem:[%s1150] sm:$0xff] %vm206, %v1148
    %s1152 = scalar_lea.vmem [#allocation4], 32
    %v1153 = vld [vmem:[%s1152] sm:$0xff]
    %v1155 = vsel %vm131, %v1153, 0
    %1157 = vmatprep.subr.mxu0 0.0
    %1158 = vmatpush1.msra.mxu0 0.0
    %1159 = vmatprep.subr.mxu0 0.0
    %1160 = vmatpush1.msra.mxu0 0.0
    %1161 = vmatprep.subr.mxu0 0.0
    %1162 = vmatpush1.msra.mxu0 0.0
    %1163 = vmatprep.subr.mxu0 0.0
    %1164 = vmatpush1.msra.mxu0 0.0
    %1165 = vmatprep.subr.mxu0 0.0
    %1166 = vmatpush1.msra.mxu0 0.0
    %1167 = vmatprep.subr.mxu0 0.0
    %1168 = vmatpush1.msra.mxu0 0.0
    %1169 = vmatprep.subr.mxu0 0.0
    %1170 = vmatpush1.msra.mxu0 0.0
    %1171 = vmatprep.subr.mxu0 0.0
    %1172 = vmatpush1.msra.mxu0 0.0
    %1173 = vmatprep.subr.mxu0 0.0
    %1174 = vmatpush1.msra.mxu0 0.0
    %1175 = vmatprep.subr.mxu0 0.0
    %1176 = vmatpush1.msra.mxu0 0.0
    %1177 = vmatprep.subr.mxu0 0.0
    %1178 = vmatpush1.msra.mxu0 0.0
    %1179 = vmatprep.subr.mxu0 0.0
    %1180 = vmatpush1.msra.mxu0 0.0
    %1181 = vmatprep.subr.mxu0 0.0
    %1182 = vmatpush1.msra.mxu0 0.0
    %1183 = vmatprep.subr.mxu0 0.0
    %1184 = vmatpush1.msra.mxu0 0.0
    %1185 = vmatprep.subr.mxu0 0.0
    %1186 = vmatpush1.msra.mxu0 %v112
    %1187 = vmatprep.subr.mxu0 0.0
    %1188 = vmatpush1.msra.mxu0 %v111
    %1189 = vmatprep.subr.mxu0 0.0
    %1190 = vmatpush2.msra.mxu0 0.0
    %1191 = vmatprep.subr.mxu0 0.0
    %1192 = vmatpush2.msra.mxu0 0.0
    %1193 = vmatprep.subr.mxu0 0.0
    %1194 = vmatpush2.msra.mxu0 0.0
    %1195 = vmatprep.subr.mxu0 0.0
    %1196 = vmatpush2.msra.mxu0 0.0
    %1197 = vmatprep.subr.mxu0 0.0
    %1198 = vmatpush2.msra.mxu0 0.0
    %1199 = vmatprep.subr.mxu0 0.0
    %1200 = vmatpush2.msra.mxu0 0.0
    %1201 = vmatprep.subr.mxu0 0.0
    %1202 = vmatpush2.msra.mxu0 0.0
    %1203 = vmatprep.subr.mxu0 0.0
    %1204 = vmatpush2.msra.mxu0 0.0
    %1205 = vmatprep.subr.mxu0 0.0
    %1206 = vmatpush2.msra.mxu0 0.0
    %1207 = vmatprep.subr.mxu0 0.0
    %1208 = vmatpush2.msra.mxu0 0.0
    %1209 = vmatprep.subr.mxu0 0.0
    %1210 = vmatpush2.msra.mxu0 0.0
    %1211 = vmatprep.subr.mxu0 0.0
    %1212 = vmatpush2.msra.mxu0 0.0
    %1213 = vmatprep.subr.mxu0 0.0
    %1214 = vmatpush2.msra.mxu0 0.0
    %1215 = vmatprep.subr.mxu0 0.0
    %1216 = vmatpush2.msra.mxu0 0.0
    %1217 = vmatprep.subr.mxu0 0.0
    %1218 = vmatpush2.msra.mxu0 0.0
    %1219 = vmatprep.subr.mxu0 0.0
    %1220 = vmatpush2.msra.mxu0 0.0
    %1221 = vmatprep.mubr.f32.mxu0 0.0
    %1222 = vmatmul.mubr.f32.gmra.mxu0 %v1155
    %v1223 = vpop.f32.mrf.mxu0
    %v1224 = vadd.f32 %v129, %v1223
    %v1225 = vpop.f32.mrf.mxu0
    %1226 = vdwg.mxu0
    %v1227 = vmax.f32 %v1224, 0.0
    %v1228 = vsel %vm206, %v1148, 0
    %1230 = vmatprep.subr.mxu0 0.0
    %1231 = vmatpush1.msra.mxu0 0.0
    %1232 = vmatprep.subr.mxu0 0.0
    %1233 = vmatpush1.msra.mxu0 0.0
    %1234 = vmatprep.subr.mxu0 0.0
    %1235 = vmatpush1.msra.mxu0 0.0
    %1236 = vmatprep.subr.mxu0 0.0
    %1237 = vmatpush1.msra.mxu0 0.0
    %1238 = vmatprep.subr.mxu0 0.0
    %1239 = vmatpush1.msra.mxu0 0.0
    %1240 = vmatprep.subr.mxu0 0.0
    %1241 = vmatpush1.msra.mxu0 0.0
    %1242 = vmatprep.subr.mxu0 0.0
    %1243 = vmatpush1.msra.mxu0 0.0
    %1244 = vmatprep.subr.mxu0 0.0
    %1245 = vmatpush1.msra.mxu0 0.0
    %1246 = vmatprep.subr.mxu0 0.0
    %1247 = vmatpush1.msra.mxu0 0.0
    %1248 = vmatprep.subr.mxu0 0.0
    %1249 = vmatpush1.msra.mxu0 0.0
    %1250 = vmatprep.subr.mxu0 0.0
    %1251 = vmatpush1.msra.mxu0 0.0
    %1252 = vmatprep.subr.mxu0 0.0
    %1253 = vmatpush1.msra.mxu0 0.0
    %1254 = vmatprep.subr.mxu0 0.0
    %1255 = vmatpush1.msra.mxu0 %v121
    %1256 = vmatprep.subr.mxu0 0.0
    %1257 = vmatpush1.msra.mxu0 %v120
    %1258 = vmatprep.subr.mxu0 0.0
    %1259 = vmatpush1.msra.mxu0 %v119
    %1260 = vmatprep.subr.mxu0 0.0
    %1261 = vmatpush1.msra.mxu0 %v118
    %1262 = vmatprep.subr.mxu0 0.0
    %1263 = vmatpush2.msra.mxu0 0.0
    %1264 = vmatprep.subr.mxu0 0.0
    %1265 = vmatpush2.msra.mxu0 0.0
    %1266 = vmatprep.subr.mxu0 0.0
    %1267 = vmatpush2.msra.mxu0 0.0
    %1268 = vmatprep.subr.mxu0 0.0
    %1269 = vmatpush2.msra.mxu0 0.0
    %1270 = vmatprep.subr.mxu0 0.0
    %1271 = vmatpush2.msra.mxu0 0.0
    %1272 = vmatprep.subr.mxu0 0.0
    %1273 = vmatpush2.msra.mxu0 0.0
    %1274 = vmatprep.subr.mxu0 0.0
    %1275 = vmatpush2.msra.mxu0 0.0
    %1276 = vmatprep.subr.mxu0 0.0
    %1277 = vmatpush2.msra.mxu0 0.0
    %1278 = vmatprep.subr.mxu0 0.0
    %1279 = vmatpush2.msra.mxu0 0.0
    %1280 = vmatprep.subr.mxu0 0.0
    %1281 = vmatpush2.msra.mxu0 0.0
    %1282 = vmatprep.subr.mxu0 0.0
    %1283 = vmatpush2.msra.mxu0 0.0
    %1284 = vmatprep.subr.mxu0 0.0
    %1285 = vmatpush2.msra.mxu0 0.0
    %1286 = vmatprep.subr.mxu0 0.0
    %1287 = vmatpush2.msra.mxu0 0.0
    %1288 = vmatprep.subr.mxu0 0.0
    %1289 = vmatpush2.msra.mxu0 0.0
    %1290 = vmatprep.subr.mxu0 0.0
    %1291 = vmatpush2.msra.mxu0 0.0
    %1292 = vmatprep.subr.mxu0 0.0
    %1293 = vmatpush2.msra.mxu0 0.0
    %1294 = vmatprep.mubr.f32.mxu0 0.0
    %1295 = vmatmul.mubr.f32.gmra.mxu0 %v1228
    %v1296 = vpop.f32.mrf.mxu0
    %v1297 = vadd.f32 0.0, %v1296
    %v1298 = vpop.f32.mrf.mxu0
    %1299 = vdwg.mxu0
    %v1301 = vsel %vm206, %v1227, 0
    %1303 = vmatprep.subr.mxu0 0.0
    %1304 = vmatpush1.msra.mxu0 0.0
    %1305 = vmatprep.subr.mxu0 0.0
    %1306 = vmatpush1.msra.mxu0 0.0
    %1307 = vmatprep.subr.mxu0 0.0
    %1308 = vmatpush1.msra.mxu0 0.0
    %1309 = vmatprep.subr.mxu0 0.0
    %1310 = vmatpush1.msra.mxu0 0.0
    %1311 = vmatprep.subr.mxu0 0.0
    %1312 = vmatpush1.msra.mxu0 0.0
    %1313 = vmatprep.subr.mxu0 0.0
    %1314 = vmatpush1.msra.mxu0 0.0
    %1315 = vmatprep.subr.mxu0 0.0
    %1316 = vmatpush1.msra.mxu0 0.0
    %1317 = vmatprep.subr.mxu0 0.0
    %1318 = vmatpush1.msra.mxu0 0.0
    %1319 = vmatprep.subr.mxu0 0.0
    %1320 = vmatpush1.msra.mxu0 0.0
    %1321 = vmatprep.subr.mxu0 0.0
    %1322 = vmatpush1.msra.mxu0 0.0
    %1323 = vmatprep.subr.mxu0 0.0
    %1324 = vmatpush1.msra.mxu0 0.0
    %1325 = vmatprep.subr.mxu0 0.0
    %1326 = vmatpush1.msra.mxu0 0.0
    %1327 = vmatprep.subr.mxu0 0.0
    %1328 = vmatpush1.msra.mxu0 %v117
    %1329 = vmatprep.subr.mxu0 0.0
    %1330 = vmatpush1.msra.mxu0 %v116
    %1331 = vmatprep.subr.mxu0 0.0
    %1332 = vmatpush1.msra.mxu0 %v115
    %1333 = vmatprep.subr.mxu0 0.0
    %1334 = vmatpush1.msra.mxu0 %v114
    %1335 = vmatprep.subr.mxu0 0.0
    %1336 = vmatpush2.msra.mxu0 0.0
    %1337 = vmatprep.subr.mxu0 0.0
    %1338 = vmatpush2.msra.mxu0 0.0
    %1339 = vmatprep.subr.mxu0 0.0
    %1340 = vmatpush2.msra.mxu0 0.0
    %1341 = vmatprep.subr.mxu0 0.0
    %1342 = vmatpush2.msra.mxu0 0.0
    %1343 = vmatprep.subr.mxu0 0.0
    %1344 = vmatpush2.msra.mxu0 0.0
    %1345 = vmatprep.subr.mxu0 0.0
    %1346 = vmatpush2.msra.mxu0 0.0
    %1347 = vmatprep.subr.mxu0 0.0
    %1348 = vmatpush2.msra.mxu0 0.0
    %1349 = vmatprep.subr.mxu0 0.0
    %1350 = vmatpush2.msra.mxu0 0.0
    %1351 = vmatprep.subr.mxu0 0.0
    %1352 = vmatpush2.msra.mxu0 0.0
    %1353 = vmatprep.subr.mxu0 0.0
    %1354 = vmatpush2.msra.mxu0 0.0
    %1355 = vmatprep.subr.mxu0 0.0
    %1356 = vmatpush2.msra.mxu0 0.0
    %1357 = vmatprep.subr.mxu0 0.0
    %1358 = vmatpush2.msra.mxu0 0.0
    %1359 = vmatprep.subr.mxu0 0.0
    %1360 = vmatpush2.msra.mxu0 0.0
    %1361 = vmatprep.subr.mxu0 0.0
    %1362 = vmatpush2.msra.mxu0 0.0
    %1363 = vmatprep.subr.mxu0 0.0
    %1364 = vmatpush2.msra.mxu0 0.0
    %1365 = vmatprep.subr.mxu0 0.0
    %1366 = vmatpush2.msra.mxu0 0.0
    %1367 = vmatprep.mubr.f32.mxu0 0.0
    %1368 = vmatmul.mubr.f32.gmra.mxu0 %v1301
    %v1369 = vpop.f32.mrf.mxu0
    %v1370 = vadd.f32 %v1297, %v1369
    %v1371 = vpop.f32.mrf.mxu0
    %1372 = vdwg.mxu0
    %v1373 = vadd.f32 %v1370, %v357
    %v1374 = vxor.u32 %v1373, 2147483648
    %v1375 = vmul.f32 %v1374, 1.442695
    %v1376 = vpow.pop %v1375
    %v1377 = vadd.f32 %v1376, 1.0
    %v1378 = vrcp.pop %v1377
    %v1379 = vmul.f32 1.0, %v1378
    %1381 = vrot.lane.b32.xlu0 %v1373, 32
    %v1382 = vpop.permute.xlu0 %1381
    %v1384 = vmul.f32 %v1379, %v1382
    %1386 = vrot.lane.b32.xlu0 %v1384, 64
    %v1387 = vpop.permute.xlu0 %1386
    %v1389 = vadd.f32 %v1373, %v1387
    %v1390 = vtanh.pop %v1389
    %v1391 = vsub.f32 1.0, %v1379
    %1393 = vrot.lane.b32.xlu0 %v1390, 96
    %v1394 = vpop.permute.xlu0 %1393
    %v1396 = vmul.f32 %v1391, %v1394
    %v1397 = vmul.f32 %v1379, %v1145
    %v1398 = vadd.f32 %v1396, %v1397
    %1400 = vrot.lane.b32.xlu0 %v1398, 96
    %v1401 = vpop.permute.xlu0 %1400
    %s1403 = scalar_lea.vmem [#allocation2], 32
    %1404 = vst.msk [vmem:[%s1403] sm:$0xff] %vm206, %v1401
    %s1405 = scalar_lea.vmem [#allocation4], 40
    %v1406 = vld [vmem:[%s1405] sm:$0xff]
    %v1408 = vsel %vm131, %v1406, 0
    %1410 = vmatprep.subr.mxu0 0.0
    %1411 = vmatpush1.msra.mxu0 0.0
    %1412 = vmatprep.subr.mxu0 0.0
    %1413 = vmatpush1.msra.mxu0 0.0
    %1414 = vmatprep.subr.mxu0 0.0
    %1415 = vmatpush1.msra.mxu0 0.0
    %1416 = vmatprep.subr.mxu0 0.0
    %1417 = vmatpush1.msra.mxu0 0.0
    %1418 = vmatprep.subr.mxu0 0.0
    %1419 = vmatpush1.msra.mxu0 0.0
    %1420 = vmatprep.subr.mxu0 0.0
    %1421 = vmatpush1.msra.mxu0 0.0
    %1422 = vmatprep.subr.mxu0 0.0
    %1423 = vmatpush1.msra.mxu0 0.0
    %1424 = vmatprep.subr.mxu0 0.0
    %1425 = vmatpush1.msra.mxu0 0.0
    %1426 = vmatprep.subr.mxu0 0.0
    %1427 = vmatpush1.msra.mxu0 0.0
    %1428 = vmatprep.subr.mxu0 0.0
    %1429 = vmatpush1.msra.mxu0 0.0
    %1430 = vmatprep.subr.mxu0 0.0
    %1431 = vmatpush1.msra.mxu0 0.0
    %1432 = vmatprep.subr.mxu0 0.0
    %1433 = vmatpush1.msra.mxu0 0.0
    %1434 = vmatprep.subr.mxu0 0.0
    %1435 = vmatpush1.msra.mxu0 0.0
    %1436 = vmatprep.subr.mxu0 0.0
    %1437 = vmatpush1.msra.mxu0 0.0
    %1438 = vmatprep.subr.mxu0 0.0
    %1439 = vmatpush1.msra.mxu0 %v112
    %1440 = vmatprep.subr.mxu0 0.0
    %1441 = vmatpush1.msra.mxu0 %v111
    %1442 = vmatprep.subr.mxu0 0.0
    %1443 = vmatpush2.msra.mxu0 0.0
    %1444 = vmatprep.subr.mxu0 0.0
    %1445 = vmatpush2.msra.mxu0 0.0
    %1446 = vmatprep.subr.mxu0 0.0
    %1447 = vmatpush2.msra.mxu0 0.0
    %1448 = vmatprep.subr.mxu0 0.0
    %1449 = vmatpush2.msra.mxu0 0.0
    %1450 = vmatprep.subr.mxu0 0.0
    %1451 = vmatpush2.msra.mxu0 0.0
    %1452 = vmatprep.subr.mxu0 0.0
    %1453 = vmatpush2.msra.mxu0 0.0
    %1454 = vmatprep.subr.mxu0 0.0
    %1455 = vmatpush2.msra.mxu0 0.0
    %1456 = vmatprep.subr.mxu0 0.0
    %1457 = vmatpush2.msra.mxu0 0.0
    %1458 = vmatprep.subr.mxu0 0.0
    %1459 = vmatpush2.msra.mxu0 0.0
    %1460 = vmatprep.subr.mxu0 0.0
    %1461 = vmatpush2.msra.mxu0 0.0
    %1462 = vmatprep.subr.mxu0 0.0
    %1463 = vmatpush2.msra.mxu0 0.0
    %1464 = vmatprep.subr.mxu0 0.0
    %1465 = vmatpush2.msra.mxu0 0.0
    %1466 = vmatprep.subr.mxu0 0.0
    %1467 = vmatpush2.msra.mxu0 0.0
    %1468 = vmatprep.subr.mxu0 0.0
    %1469 = vmatpush2.msra.mxu0 0.0
    %1470 = vmatprep.subr.mxu0 0.0
    %1471 = vmatpush2.msra.mxu0 0.0
    %1472 = vmatprep.subr.mxu0 0.0
    %1473 = vmatpush2.msra.mxu0 0.0
    %1474 = vmatprep.mubr.f32.mxu0 0.0
    %1475 = vmatmul.mubr.f32.gmra.mxu0 %v1408
    %v1476 = vpop.f32.mrf.mxu0
    %v1477 = vadd.f32 %v129, %v1476
    %v1478 = vpop.f32.mrf.mxu0
    %1479 = vdwg.mxu0
    %v1480 = vmax.f32 %v1477, 0.0
    %v1481 = vsel %vm206, %v1401, 0
    %1483 = vmatprep.subr.mxu0 0.0
    %1484 = vmatpush1.msra.mxu0 0.0
    %1485 = vmatprep.subr.mxu0 0.0
    %1486 = vmatpush1.msra.mxu0 0.0
    %1487 = vmatprep.subr.mxu0 0.0
    %1488 = vmatpush1.msra.mxu0 0.0
    %1489 = vmatprep.subr.mxu0 0.0
    %1490 = vmatpush1.msra.mxu0 0.0
    %1491 = vmatprep.subr.mxu0 0.0
    %1492 = vmatpush1.msra.mxu0 0.0
    %1493 = vmatprep.subr.mxu0 0.0
    %1494 = vmatpush1.msra.mxu0 0.0
    %1495 = vmatprep.subr.mxu0 0.0
    %1496 = vmatpush1.msra.mxu0 0.0
    %1497 = vmatprep.subr.mxu0 0.0
    %1498 = vmatpush1.msra.mxu0 0.0
    %1499 = vmatprep.subr.mxu0 0.0
    %1500 = vmatpush1.msra.mxu0 0.0
    %1501 = vmatprep.subr.mxu0 0.0
    %1502 = vmatpush1.msra.mxu0 0.0
    %1503 = vmatprep.subr.mxu0 0.0
    %1504 = vmatpush1.msra.mxu0 0.0
    %1505 = vmatprep.subr.mxu0 0.0
    %1506 = vmatpush1.msra.mxu0 0.0
    %1507 = vmatprep.subr.mxu0 0.0
    %1508 = vmatpush1.msra.mxu0 %v121
    %1509 = vmatprep.subr.mxu0 0.0
    %1510 = vmatpush1.msra.mxu0 %v120
    %1511 = vmatprep.subr.mxu0 0.0
    %1512 = vmatpush1.msra.mxu0 %v119
    %1513 = vmatprep.subr.mxu0 0.0
    %1514 = vmatpush1.msra.mxu0 %v118
    %1515 = vmatprep.subr.mxu0 0.0
    %1516 = vmatpush2.msra.mxu0 0.0
    %1517 = vmatprep.subr.mxu0 0.0
    %1518 = vmatpush2.msra.mxu0 0.0
    %1519 = vmatprep.subr.mxu0 0.0
    %1520 = vmatpush2.msra.mxu0 0.0
    %1521 = vmatprep.subr.mxu0 0.0
    %1522 = vmatpush2.msra.mxu0 0.0
    %1523 = vmatprep.subr.mxu0 0.0
    %1524 = vmatpush2.msra.mxu0 0.0
    %1525 = vmatprep.subr.mxu0 0.0
    %1526 = vmatpush2.msra.mxu0 0.0
    %1527 = vmatprep.subr.mxu0 0.0
    %1528 = vmatpush2.msra.mxu0 0.0
    %1529 = vmatprep.subr.mxu0 0.0
    %1530 = vmatpush2.msra.mxu0 0.0
    %1531 = vmatprep.subr.mxu0 0.0
    %1532 = vmatpush2.msra.mxu0 0.0
    %1533 = vmatprep.subr.mxu0 0.0
    %1534 = vmatpush2.msra.mxu0 0.0
    %1535 = vmatprep.subr.mxu0 0.0
    %1536 = vmatpush2.msra.mxu0 0.0
    %1537 = vmatprep.subr.mxu0 0.0
    %1538 = vmatpush2.msra.mxu0 0.0
    %1539 = vmatprep.subr.mxu0 0.0
    %1540 = vmatpush2.msra.mxu0 0.0
    %1541 = vmatprep.subr.mxu0 0.0
    %1542 = vmatpush2.msra.mxu0 0.0
    %1543 = vmatprep.subr.mxu0 0.0
    %1544 = vmatpush2.msra.mxu0 0.0
    %1545 = vmatprep.subr.mxu0 0.0
    %1546 = vmatpush2.msra.mxu0 0.0
    %1547 = vmatprep.mubr.f32.mxu0 0.0
    %1548 = vmatmul.mubr.f32.gmra.mxu0 %v1481
    %v1549 = vpop.f32.mrf.mxu0
    %v1550 = vadd.f32 0.0, %v1549
    %v1551 = vpop.f32.mrf.mxu0
    %1552 = vdwg.mxu0
    %v1554 = vsel %vm206, %v1480, 0
    %1556 = vmatprep.subr.mxu0 0.0
    %1557 = vmatpush1.msra.mxu0 0.0
    %1558 = vmatprep.subr.mxu0 0.0
    %1559 = vmatpush1.msra.mxu0 0.0
    %1560 = vmatprep.subr.mxu0 0.0
    %1561 = vmatpush1.msra.mxu0 0.0
    %1562 = vmatprep.subr.mxu0 0.0
    %1563 = vmatpush1.msra.mxu0 0.0
    %1564 = vmatprep.subr.mxu0 0.0
    %1565 = vmatpush1.msra.mxu0 0.0
    %1566 = vmatprep.subr.mxu0 0.0
    %1567 = vmatpush1.msra.mxu0 0.0
    %1568 = vmatprep.subr.mxu0 0.0
    %1569 = vmatpush1.msra.mxu0 0.0
    %1570 = vmatprep.subr.mxu0 0.0
    %1571 = vmatpush1.msra.mxu0 0.0
    %1572 = vmatprep.subr.mxu0 0.0
    %1573 = vmatpush1.msra.mxu0 0.0
    %1574 = vmatprep.subr.mxu0 0.0
    %1575 = vmatpush1.msra.mxu0 0.0
    %1576 = vmatprep.subr.mxu0 0.0
    %1577 = vmatpush1.msra.mxu0 0.0
    %1578 = vmatprep.subr.mxu0 0.0
    %1579 = vmatpush1.msra.mxu0 0.0
    %1580 = vmatprep.subr.mxu0 0.0
    %1581 = vmatpush1.msra.mxu0 %v117
    %1582 = vmatprep.subr.mxu0 0.0
    %1583 = vmatpush1.msra.mxu0 %v116
    %1584 = vmatprep.subr.mxu0 0.0
    %1585 = vmatpush1.msra.mxu0 %v115
    %1586 = vmatprep.subr.mxu0 0.0
    %1587 = vmatpush1.msra.mxu0 %v114
    %1588 = vmatprep.subr.mxu0 0.0
    %1589 = vmatpush2.msra.mxu0 0.0
    %1590 = vmatprep.subr.mxu0 0.0
    %1591 = vmatpush2.msra.mxu0 0.0
    %1592 = vmatprep.subr.mxu0 0.0
    %1593 = vmatpush2.msra.mxu0 0.0
    %1594 = vmatprep.subr.mxu0 0.0
    %1595 = vmatpush2.msra.mxu0 0.0
    %1596 = vmatprep.subr.mxu0 0.0
    %1597 = vmatpush2.msra.mxu0 0.0
    %1598 = vmatprep.subr.mxu0 0.0
    %1599 = vmatpush2.msra.mxu0 0.0
    %1600 = vmatprep.subr.mxu0 0.0
    %1601 = vmatpush2.msra.mxu0 0.0
    %1602 = vmatprep.subr.mxu0 0.0
    %1603 = vmatpush2.msra.mxu0 0.0
    %1604 = vmatprep.subr.mxu0 0.0
    %1605 = vmatpush2.msra.mxu0 0.0
    %1606 = vmatprep.subr.mxu0 0.0
    %1607 = vmatpush2.msra.mxu0 0.0
    %1608 = vmatprep.subr.mxu0 0.0
    %1609 = vmatpush2.msra.mxu0 0.0
    %1610 = vmatprep.subr.mxu0 0.0
    %1611 = vmatpush2.msra.mxu0 0.0
    %1612 = vmatprep.subr.mxu0 0.0
    %1613 = vmatpush2.msra.mxu0 0.0
    %1614 = vmatprep.subr.mxu0 0.0
    %1615 = vmatpush2.msra.mxu0 0.0
    %1616 = vmatprep.subr.mxu0 0.0
    %1617 = vmatpush2.msra.mxu0 0.0
    %1618 = vmatprep.subr.mxu0 0.0
    %1619 = vmatpush2.msra.mxu0 0.0
    %1620 = vmatprep.mubr.f32.mxu0 0.0
    %1621 = vmatmul.mubr.f32.gmra.mxu0 %v1554
    %v1622 = vpop.f32.mrf.mxu0
    %v1623 = vadd.f32 %v1550, %v1622
    %v1624 = vpop.f32.mrf.mxu0
    %1625 = vdwg.mxu0
    %v1626 = vadd.f32 %v1623, %v357
    %v1627 = vxor.u32 %v1626, 2147483648
    %v1628 = vmul.f32 %v1627, 1.442695
    %v1629 = vpow.pop %v1628
    %v1630 = vadd.f32 %v1629, 1.0
    %v1631 = vrcp.pop %v1630
    %v1632 = vmul.f32 1.0, %v1631
    %1634 = vrot.lane.b32.xlu0 %v1626, 32
    %v1635 = vpop.permute.xlu0 %1634
    %v1637 = vmul.f32 %v1632, %v1635
    %1639 = vrot.lane.b32.xlu0 %v1637, 64
    %v1640 = vpop.permute.xlu0 %1639
    %v1642 = vadd.f32 %v1626, %v1640
    %v1643 = vtanh.pop %v1642
    %v1644 = vsub.f32 1.0, %v1632
    %1646 = vrot.lane.b32.xlu0 %v1643, 96
    %v1647 = vpop.permute.xlu0 %1646
    %v1649 = vmul.f32 %v1644, %v1647
    %v1650 = vmul.f32 %v1632, %v1398
    %v1651 = vadd.f32 %v1649, %v1650
    %1653 = vrot.lane.b32.xlu0 %v1651, 96
    %v1654 = vpop.permute.xlu0 %1653
    %s1656 = scalar_lea.vmem [#allocation2], 40
    %1657 = vst.msk [vmem:[%s1656] sm:$0xff] %vm206, %v1654
    %s1658 = scalar_lea.vmem [#allocation4], 48
    %v1659 = vld [vmem:[%s1658] sm:$0xff]
    %v1661 = vsel %vm131, %v1659, 0
    %1663 = vmatprep.subr.mxu0 0.0
    %1664 = vmatpush1.msra.mxu0 0.0
    %1665 = vmatprep.subr.mxu0 0.0
    %1666 = vmatpush1.msra.mxu0 0.0
    %1667 = vmatprep.subr.mxu0 0.0
    %1668 = vmatpush1.msra.mxu0 0.0
    %1669 = vmatprep.subr.mxu0 0.0
    %1670 = vmatpush1.msra.mxu0 0.0
    %1671 = vmatprep.subr.mxu0 0.0
    %1672 = vmatpush1.msra.mxu0 0.0
    %1673 = vmatprep.subr.mxu0 0.0
    %1674 = vmatpush1.msra.mxu0 0.0
    %1675 = vmatprep.subr.mxu0 0.0
    %1676 = vmatpush1.msra.mxu0 0.0
    %1677 = vmatprep.subr.mxu0 0.0
    %1678 = vmatpush1.msra.mxu0 0.0
    %1679 = vmatprep.subr.mxu0 0.0
    %1680 = vmatpush1.msra.mxu0 0.0
    %1681 = vmatprep.subr.mxu0 0.0
    %1682 = vmatpush1.msra.mxu0 0.0
    %1683 = vmatprep.subr.mxu0 0.0
    %1684 = vmatpush1.msra.mxu0 0.0
    %1685 = vmatprep.subr.mxu0 0.0
    %1686 = vmatpush1.msra.mxu0 0.0
    %1687 = vmatprep.subr.mxu0 0.0
    %1688 = vmatpush1.msra.mxu0 0.0
    %1689 = vmatprep.subr.mxu0 0.0
    %1690 = vmatpush1.msra.mxu0 0.0
    %1691 = vmatprep.subr.mxu0 0.0
    %1692 = vmatpush1.msra.mxu0 %v112
    %1693 = vmatprep.subr.mxu0 0.0
    %1694 = vmatpush1.msra.mxu0 %v111
    %1695 = vmatprep.subr.mxu0 0.0
    %1696 = vmatpush2.msra.mxu0 0.0
    %1697 = vmatprep.subr.mxu0 0.0
    %1698 = vmatpush2.msra.mxu0 0.0
    %1699 = vmatprep.subr.mxu0 0.0
    %1700 = vmatpush2.msra.mxu0 0.0
    %1701 = vmatprep.subr.mxu0 0.0
    %1702 = vmatpush2.msra.mxu0 0.0
    %1703 = vmatprep.subr.mxu0 0.0
    %1704 = vmatpush2.msra.mxu0 0.0
    %1705 = vmatprep.subr.mxu0 0.0
    %1706 = vmatpush2.msra.mxu0 0.0
    %1707 = vmatprep.subr.mxu0 0.0
    %1708 = vmatpush2.msra.mxu0 0.0
    %1709 = vmatprep.subr.mxu0 0.0
    %1710 = vmatpush2.msra.mxu0 0.0
    %1711 = vmatprep.subr.mxu0 0.0
    %1712 = vmatpush2.msra.mxu0 0.0
    %1713 = vmatprep.subr.mxu0 0.0
    %1714 = vmatpush2.msra.mxu0 0.0
    %1715 = vmatprep.subr.mxu0 0.0
    %1716 = vmatpush2.msra.mxu0 0.0
    %1717 = vmatprep.subr.mxu0 0.0
    %1718 = vmatpush2.msra.mxu0 0.0
    %1719 = vmatprep.subr.mxu0 0.0
    %1720 = vmatpush2.msra.mxu0 0.0
    %1721 = vmatprep.subr.mxu0 0.0
    %1722 = vmatpush2.msra.mxu0 0.0
    %1723 = vmatprep.subr.mxu0 0.0
    %1724 = vmatpush2.msra.mxu0 0.0
    %1725 = vmatprep.subr.mxu0 0.0
    %1726 = vmatpush2.msra.mxu0 0.0
    %1727 = vmatprep.mubr.f32.mxu0 0.0
    %1728 = vmatmul.mubr.f32.gmra.mxu0 %v1661
    %v1729 = vpop.f32.mrf.mxu0
    %v1730 = vadd.f32 %v129, %v1729
    %v1731 = vpop.f32.mrf.mxu0
    %1732 = vdwg.mxu0
    %v1733 = vmax.f32 %v1730, 0.0
    %v1734 = vsel %vm206, %v1654, 0
    %1736 = vmatprep.subr.mxu0 0.0
    %1737 = vmatpush1.msra.mxu0 0.0
    %1738 = vmatprep.subr.mxu0 0.0
    %1739 = vmatpush1.msra.mxu0 0.0
    %1740 = vmatprep.subr.mxu0 0.0
    %1741 = vmatpush1.msra.mxu0 0.0
    %1742 = vmatprep.subr.mxu0 0.0
    %1743 = vmatpush1.msra.mxu0 0.0
    %1744 = vmatprep.subr.mxu0 0.0
    %1745 = vmatpush1.msra.mxu0 0.0
    %1746 = vmatprep.subr.mxu0 0.0
    %1747 = vmatpush1.msra.mxu0 0.0
    %1748 = vmatprep.subr.mxu0 0.0
    %1749 = vmatpush1.msra.mxu0 0.0
    %1750 = vmatprep.subr.mxu0 0.0
    %1751 = vmatpush1.msra.mxu0 0.0
    %1752 = vmatprep.subr.mxu0 0.0
    %1753 = vmatpush1.msra.mxu0 0.0
    %1754 = vmatprep.subr.mxu0 0.0
    %1755 = vmatpush1.msra.mxu0 0.0
    %1756 = vmatprep.subr.mxu0 0.0
    %1757 = vmatpush1.msra.mxu0 0.0
    %1758 = vmatprep.subr.mxu0 0.0
    %1759 = vmatpush1.msra.mxu0 0.0
    %1760 = vmatprep.subr.mxu0 0.0
    %1761 = vmatpush1.msra.mxu0 %v121
    %1762 = vmatprep.subr.mxu0 0.0
    %1763 = vmatpush1.msra.mxu0 %v120
    %1764 = vmatprep.subr.mxu0 0.0
    %1765 = vmatpush1.msra.mxu0 %v119
    %1766 = vmatprep.subr.mxu0 0.0
    %1767 = vmatpush1.msra.mxu0 %v118
    %1768 = vmatprep.subr.mxu0 0.0
    %1769 = vmatpush2.msra.mxu0 0.0
    %1770 = vmatprep.subr.mxu0 0.0
    %1771 = vmatpush2.msra.mxu0 0.0
    %1772 = vmatprep.subr.mxu0 0.0
    %1773 = vmatpush2.msra.mxu0 0.0
    %1774 = vmatprep.subr.mxu0 0.0
    %1775 = vmatpush2.msra.mxu0 0.0
    %1776 = vmatprep.subr.mxu0 0.0
    %1777 = vmatpush2.msra.mxu0 0.0
    %1778 = vmatprep.subr.mxu0 0.0
    %1779 = vmatpush2.msra.mxu0 0.0
    %1780 = vmatprep.subr.mxu0 0.0
    %1781 = vmatpush2.msra.mxu0 0.0
    %1782 = vmatprep.subr.mxu0 0.0
    %1783 = vmatpush2.msra.mxu0 0.0
    %1784 = vmatprep.subr.mxu0 0.0
    %1785 = vmatpush2.msra.mxu0 0.0
    %1786 = vmatprep.subr.mxu0 0.0
    %1787 = vmatpush2.msra.mxu0 0.0
    %1788 = vmatprep.subr.mxu0 0.0
    %1789 = vmatpush2.msra.mxu0 0.0
    %1790 = vmatprep.subr.mxu0 0.0
    %1791 = vmatpush2.msra.mxu0 0.0
    %1792 = vmatprep.subr.mxu0 0.0
    %1793 = vmatpush2.msra.mxu0 0.0
    %1794 = vmatprep.subr.mxu0 0.0
    %1795 = vmatpush2.msra.mxu0 0.0
    %1796 = vmatprep.subr.mxu0 0.0
    %1797 = vmatpush2.msra.mxu0 0.0
    %1798 = vmatprep.subr.mxu0 0.0
    %1799 = vmatpush2.msra.mxu0 0.0
    %1800 = vmatprep.mubr.f32.mxu0 0.0
    %1801 = vmatmul.mubr.f32.gmra.mxu0 %v1734
    %v1802 = vpop.f32.mrf.mxu0
    %v1803 = vadd.f32 0.0, %v1802
    %v1804 = vpop.f32.mrf.mxu0
    %1805 = vdwg.mxu0
    %v1807 = vsel %vm206, %v1733, 0
    %1809 = vmatprep.subr.mxu0 0.0
    %1810 = vmatpush1.msra.mxu0 0.0
    %1811 = vmatprep.subr.mxu0 0.0
    %1812 = vmatpush1.msra.mxu0 0.0
    %1813 = vmatprep.subr.mxu0 0.0
    %1814 = vmatpush1.msra.mxu0 0.0
    %1815 = vmatprep.subr.mxu0 0.0
    %1816 = vmatpush1.msra.mxu0 0.0
    %1817 = vmatprep.subr.mxu0 0.0
    %1818 = vmatpush1.msra.mxu0 0.0
    %1819 = vmatprep.subr.mxu0 0.0
    %1820 = vmatpush1.msra.mxu0 0.0
    %1821 = vmatprep.subr.mxu0 0.0
    %1822 = vmatpush1.msra.mxu0 0.0
    %1823 = vmatprep.subr.mxu0 0.0
    %1824 = vmatpush1.msra.mxu0 0.0
    %1825 = vmatprep.subr.mxu0 0.0
    %1826 = vmatpush1.msra.mxu0 0.0
    %1827 = vmatprep.subr.mxu0 0.0
    %1828 = vmatpush1.msra.mxu0 0.0
    %1829 = vmatprep.subr.mxu0 0.0
    %1830 = vmatpush1.msra.mxu0 0.0
    %1831 = vmatprep.subr.mxu0 0.0
    %1832 = vmatpush1.msra.mxu0 0.0
    %1833 = vmatprep.subr.mxu0 0.0
    %1834 = vmatpush1.msra.mxu0 %v117
    %1835 = vmatprep.subr.mxu0 0.0
    %1836 = vmatpush1.msra.mxu0 %v116
    %1837 = vmatprep.subr.mxu0 0.0
    %1838 = vmatpush1.msra.mxu0 %v115
    %1839 = vmatprep.subr.mxu0 0.0
    %1840 = vmatpush1.msra.mxu0 %v114
    %1841 = vmatprep.subr.mxu0 0.0
    %1842 = vmatpush2.msra.mxu0 0.0
    %1843 = vmatprep.subr.mxu0 0.0
    %1844 = vmatpush2.msra.mxu0 0.0
    %1845 = vmatprep.subr.mxu0 0.0
    %1846 = vmatpush2.msra.mxu0 0.0
    %1847 = vmatprep.subr.mxu0 0.0
    %1848 = vmatpush2.msra.mxu0 0.0
    %1849 = vmatprep.subr.mxu0 0.0
    %1850 = vmatpush2.msra.mxu0 0.0
    %1851 = vmatprep.subr.mxu0 0.0
    %1852 = vmatpush2.msra.mxu0 0.0
    %1853 = vmatprep.subr.mxu0 0.0
    %1854 = vmatpush2.msra.mxu0 0.0
    %1855 = vmatprep.subr.mxu0 0.0
    %1856 = vmatpush2.msra.mxu0 0.0
    %1857 = vmatprep.subr.mxu0 0.0
    %1858 = vmatpush2.msra.mxu0 0.0
    %1859 = vmatprep.subr.mxu0 0.0
    %1860 = vmatpush2.msra.mxu0 0.0
    %1861 = vmatprep.subr.mxu0 0.0
    %1862 = vmatpush2.msra.mxu0 0.0
    %1863 = vmatprep.subr.mxu0 0.0
    %1864 = vmatpush2.msra.mxu0 0.0
    %1865 = vmatprep.subr.mxu0 0.0
    %1866 = vmatpush2.msra.mxu0 0.0
    %1867 = vmatprep.subr.mxu0 0.0
    %1868 = vmatpush2.msra.mxu0 0.0
    %1869 = vmatprep.subr.mxu0 0.0
    %1870 = vmatpush2.msra.mxu0 0.0
    %1871 = vmatprep.subr.mxu0 0.0
    %1872 = vmatpush2.msra.mxu0 0.0
    %1873 = vmatprep.mubr.f32.mxu0 0.0
    %1874 = vmatmul.mubr.f32.gmra.mxu0 %v1807
    %v1875 = vpop.f32.mrf.mxu0
    %v1876 = vadd.f32 %v1803, %v1875
    %v1877 = vpop.f32.mrf.mxu0
    %1878 = vdwg.mxu0
    %v1879 = vadd.f32 %v1876, %v357
    %v1880 = vxor.u32 %v1879, 2147483648
    %v1881 = vmul.f32 %v1880, 1.442695
    %v1882 = vpow.pop %v1881
    %v1883 = vadd.f32 %v1882, 1.0
    %v1884 = vrcp.pop %v1883
    %v1885 = vmul.f32 1.0, %v1884
    %1887 = vrot.lane.b32.xlu0 %v1879, 32
    %v1888 = vpop.permute.xlu0 %1887
    %v1890 = vmul.f32 %v1885, %v1888
    %1892 = vrot.lane.b32.xlu0 %v1890, 64
    %v1893 = vpop.permute.xlu0 %1892
    %v1895 = vadd.f32 %v1879, %v1893
    %v1896 = vtanh.pop %v1895
    %v1897 = vsub.f32 1.0, %v1885
    %1899 = vrot.lane.b32.xlu0 %v1896, 96
    %v1900 = vpop.permute.xlu0 %1899
    %v1902 = vmul.f32 %v1897, %v1900
    %v1903 = vmul.f32 %v1885, %v1651
    %v1904 = vadd.f32 %v1902, %v1903
    %1906 = vrot.lane.b32.xlu0 %v1904, 96
    %v1907 = vpop.permute.xlu0 %1906
    %s1909 = scalar_lea.vmem [#allocation2], 48
    %1910 = vst.msk [vmem:[%s1909] sm:$0xff] %vm206, %v1907
    %s1911 = scalar_lea.vmem [#allocation4], 56
    %v1912 = vld [vmem:[%s1911] sm:$0xff]
    %v1914 = vsel %vm131, %v1912, 0
    %1916 = vmatprep.subr.mxu0 0.0
    %1917 = vmatpush1.msra.mxu0 0.0
    %1918 = vmatprep.subr.mxu0 0.0
    %1919 = vmatpush1.msra.mxu0 0.0
    %1920 = vmatprep.subr.mxu0 0.0
    %1921 = vmatpush1.msra.mxu0 0.0
    %1922 = vmatprep.subr.mxu0 0.0
    %1923 = vmatpush1.msra.mxu0 0.0
    %1924 = vmatprep.subr.mxu0 0.0
    %1925 = vmatpush1.msra.mxu0 0.0
    %1926 = vmatprep.subr.mxu0 0.0
    %1927 = vmatpush1.msra.mxu0 0.0
    %1928 = vmatprep.subr.mxu0 0.0
    %1929 = vmatpush1.msra.mxu0 0.0
    %1930 = vmatprep.subr.mxu0 0.0
    %1931 = vmatpush1.msra.mxu0 0.0
    %1932 = vmatprep.subr.mxu0 0.0
    %1933 = vmatpush1.msra.mxu0 0.0
    %1934 = vmatprep.subr.mxu0 0.0
    %1935 = vmatpush1.msra.mxu0 0.0
    %1936 = vmatprep.subr.mxu0 0.0
    %1937 = vmatpush1.msra.mxu0 0.0
    %1938 = vmatprep.subr.mxu0 0.0
    %1939 = vmatpush1.msra.mxu0 0.0
    %1940 = vmatprep.subr.mxu0 0.0
    %1941 = vmatpush1.msra.mxu0 0.0
    %1942 = vmatprep.subr.mxu0 0.0
    %1943 = vmatpush1.msra.mxu0 0.0
    %1944 = vmatprep.subr.mxu0 0.0
    %1945 = vmatpush1.msra.mxu0 %v112
    %1946 = vmatprep.subr.mxu0 0.0
    %1947 = vmatpush1.msra.mxu0 %v111
    %1948 = vmatprep.subr.mxu0 0.0
    %1949 = vmatpush2.msra.mxu0 0.0
    %1950 = vmatprep.subr.mxu0 0.0
    %1951 = vmatpush2.msra.mxu0 0.0
    %1952 = vmatprep.subr.mxu0 0.0
    %1953 = vmatpush2.msra.mxu0 0.0
    %1954 = vmatprep.subr.mxu0 0.0
    %1955 = vmatpush2.msra.mxu0 0.0
    %1956 = vmatprep.subr.mxu0 0.0
    %1957 = vmatpush2.msra.mxu0 0.0
    %1958 = vmatprep.subr.mxu0 0.0
    %1959 = vmatpush2.msra.mxu0 0.0
    %1960 = vmatprep.subr.mxu0 0.0
    %1961 = vmatpush2.msra.mxu0 0.0
    %1962 = vmatprep.subr.mxu0 0.0
    %1963 = vmatpush2.msra.mxu0 0.0
    %1964 = vmatprep.subr.mxu0 0.0
    %1965 = vmatpush2.msra.mxu0 0.0
    %1966 = vmatprep.subr.mxu0 0.0
    %1967 = vmatpush2.msra.mxu0 0.0
    %1968 = vmatprep.subr.mxu0 0.0
    %1969 = vmatpush2.msra.mxu0 0.0
    %1970 = vmatprep.subr.mxu0 0.0
    %1971 = vmatpush2.msra.mxu0 0.0
    %1972 = vmatprep.subr.mxu0 0.0
    %1973 = vmatpush2.msra.mxu0 0.0
    %1974 = vmatprep.subr.mxu0 0.0
    %1975 = vmatpush2.msra.mxu0 0.0
    %1976 = vmatprep.subr.mxu0 0.0
    %1977 = vmatpush2.msra.mxu0 0.0
    %1978 = vmatprep.subr.mxu0 0.0
    %1979 = vmatpush2.msra.mxu0 0.0
    %1980 = vmatprep.mubr.f32.mxu0 0.0
    %1981 = vmatmul.mubr.f32.gmra.mxu0 %v1914
    %v1982 = vpop.f32.mrf.mxu0
    %v1983 = vadd.f32 %v129, %v1982
    %v1984 = vpop.f32.mrf.mxu0
    %1985 = vdwg.mxu0
    %v1986 = vmax.f32 %v1983, 0.0
    %v1987 = vsel %vm206, %v1907, 0
    %1989 = vmatprep.subr.mxu0 0.0
    %1990 = vmatpush1.msra.mxu0 0.0
    %1991 = vmatprep.subr.mxu0 0.0
    %1992 = vmatpush1.msra.mxu0 0.0
    %1993 = vmatprep.subr.mxu0 0.0
    %1994 = vmatpush1.msra.mxu0 0.0
    %1995 = vmatprep.subr.mxu0 0.0
    %1996 = vmatpush1.msra.mxu0 0.0
    %1997 = vmatprep.subr.mxu0 0.0
    %1998 = vmatpush1.msra.mxu0 0.0
    %1999 = vmatprep.subr.mxu0 0.0
    %2000 = vmatpush1.msra.mxu0 0.0
    %2001 = vmatprep.subr.mxu0 0.0
    %2002 = vmatpush1.msra.mxu0 0.0
    %2003 = vmatprep.subr.mxu0 0.0
    %2004 = vmatpush1.msra.mxu0 0.0
    %2005 = vmatprep.subr.mxu0 0.0
    %2006 = vmatpush1.msra.mxu0 0.0
    %2007 = vmatprep.subr.mxu0 0.0
    %2008 = vmatpush1.msra.mxu0 0.0
    %2009 = vmatprep.subr.mxu0 0.0
    %2010 = vmatpush1.msra.mxu0 0.0
    %2011 = vmatprep.subr.mxu0 0.0
    %2012 = vmatpush1.msra.mxu0 0.0
    %2013 = vmatprep.subr.mxu0 0.0
    %2014 = vmatpush1.msra.mxu0 %v121
    %2015 = vmatprep.subr.mxu0 0.0
    %2016 = vmatpush1.msra.mxu0 %v120
    %2017 = vmatprep.subr.mxu0 0.0
    %2018 = vmatpush1.msra.mxu0 %v119
    %2019 = vmatprep.subr.mxu0 0.0
    %2020 = vmatpush1.msra.mxu0 %v118
    %2021 = vmatprep.subr.mxu0 0.0
    %2022 = vmatpush2.msra.mxu0 0.0
    %2023 = vmatprep.subr.mxu0 0.0
    %2024 = vmatpush2.msra.mxu0 0.0
    %2025 = vmatprep.subr.mxu0 0.0
    %2026 = vmatpush2.msra.mxu0 0.0
    %2027 = vmatprep.subr.mxu0 0.0
    %2028 = vmatpush2.msra.mxu0 0.0
    %2029 = vmatprep.subr.mxu0 0.0
    %2030 = vmatpush2.msra.mxu0 0.0
    %2031 = vmatprep.subr.mxu0 0.0
    %2032 = vmatpush2.msra.mxu0 0.0
    %2033 = vmatprep.subr.mxu0 0.0
    %2034 = vmatpush2.msra.mxu0 0.0
    %2035 = vmatprep.subr.mxu0 0.0
    %2036 = vmatpush2.msra.mxu0 0.0
    %2037 = vmatprep.subr.mxu0 0.0
    %2038 = vmatpush2.msra.mxu0 0.0
    %2039 = vmatprep.subr.mxu0 0.0
    %2040 = vmatpush2.msra.mxu0 0.0
    %2041 = vmatprep.subr.mxu0 0.0
    %2042 = vmatpush2.msra.mxu0 0.0
    %2043 = vmatprep.subr.mxu0 0.0
    %2044 = vmatpush2.msra.mxu0 0.0
    %2045 = vmatprep.subr.mxu0 0.0
    %2046 = vmatpush2.msra.mxu0 0.0
    %2047 = vmatprep.subr.mxu0 0.0
    %2048 = vmatpush2.msra.mxu0 0.0
    %2049 = vmatprep.subr.mxu0 0.0
    %2050 = vmatpush2.msra.mxu0 0.0
    %2051 = vmatprep.subr.mxu0 0.0
    %2052 = vmatpush2.msra.mxu0 0.0
    %2053 = vmatprep.mubr.f32.mxu0 0.0
    %2054 = vmatmul.mubr.f32.gmra.mxu0 %v1987
    %v2055 = vpop.f32.mrf.mxu0
    %v2056 = vadd.f32 0.0, %v2055
    %v2057 = vpop.f32.mrf.mxu0
    %2058 = vdwg.mxu0
    %v2060 = vsel %vm206, %v1986, 0
    %2062 = vmatprep.subr.mxu0 0.0
    %2063 = vmatpush1.msra.mxu0 0.0
    %2064 = vmatprep.subr.mxu0 0.0
    %2065 = vmatpush1.msra.mxu0 0.0
    %2066 = vmatprep.subr.mxu0 0.0
    %2067 = vmatpush1.msra.mxu0 0.0
    %2068 = vmatprep.subr.mxu0 0.0
    %2069 = vmatpush1.msra.mxu0 0.0
    %2070 = vmatprep.subr.mxu0 0.0
    %2071 = vmatpush1.msra.mxu0 0.0
    %2072 = vmatprep.subr.mxu0 0.0
    %2073 = vmatpush1.msra.mxu0 0.0
    %2074 = vmatprep.subr.mxu0 0.0
    %2075 = vmatpush1.msra.mxu0 0.0
    %2076 = vmatprep.subr.mxu0 0.0
    %2077 = vmatpush1.msra.mxu0 0.0
    %2078 = vmatprep.subr.mxu0 0.0
    %2079 = vmatpush1.msra.mxu0 0.0
    %2080 = vmatprep.subr.mxu0 0.0
    %2081 = vmatpush1.msra.mxu0 0.0
    %2082 = vmatprep.subr.mxu0 0.0
    %2083 = vmatpush1.msra.mxu0 0.0
    %2084 = vmatprep.subr.mxu0 0.0
    %2085 = vmatpush1.msra.mxu0 0.0
    %2086 = vmatprep.subr.mxu0 0.0
    %2087 = vmatpush1.msra.mxu0 %v117
    %2088 = vmatprep.subr.mxu0 0.0
    %2089 = vmatpush1.msra.mxu0 %v116
    %2090 = vmatprep.subr.mxu0 0.0
    %2091 = vmatpush1.msra.mxu0 %v115
    %2092 = vmatprep.subr.mxu0 0.0
    %2093 = vmatpush1.msra.mxu0 %v114
    %2094 = vmatprep.subr.mxu0 0.0
    %2095 = vmatpush2.msra.mxu0 0.0
    %2096 = vmatprep.subr.mxu0 0.0
    %2097 = vmatpush2.msra.mxu0 0.0
    %2098 = vmatprep.subr.mxu0 0.0
    %2099 = vmatpush2.msra.mxu0 0.0
    %2100 = vmatprep.subr.mxu0 0.0
    %2101 = vmatpush2.msra.mxu0 0.0
    %2102 = vmatprep.subr.mxu0 0.0
    %2103 = vmatpush2.msra.mxu0 0.0
    %2104 = vmatprep.subr.mxu0 0.0
    %2105 = vmatpush2.msra.mxu0 0.0
    %2106 = vmatprep.subr.mxu0 0.0
    %2107 = vmatpush2.msra.mxu0 0.0
    %2108 = vmatprep.subr.mxu0 0.0
    %2109 = vmatpush2.msra.mxu0 0.0
    %2110 = vmatprep.subr.mxu0 0.0
    %2111 = vmatpush2.msra.mxu0 0.0
    %2112 = vmatprep.subr.mxu0 0.0
    %2113 = vmatpush2.msra.mxu0 0.0
    %2114 = vmatprep.subr.mxu0 0.0
    %2115 = vmatpush2.msra.mxu0 0.0
    %2116 = vmatprep.subr.mxu0 0.0
    %2117 = vmatpush2.msra.mxu0 0.0
    %2118 = vmatprep.subr.mxu0 0.0
    %2119 = vmatpush2.msra.mxu0 0.0
    %2120 = vmatprep.subr.mxu0 0.0
    %2121 = vmatpush2.msra.mxu0 0.0
    %2122 = vmatprep.subr.mxu0 0.0
    %2123 = vmatpush2.msra.mxu0 0.0
    %2124 = vmatprep.subr.mxu0 0.0
    %2125 = vmatpush2.msra.mxu0 0.0
    %2126 = vmatprep.mubr.f32.mxu0 0.0
    %2127 = vmatmul.mubr.f32.gmra.mxu0 %v2060
    %v2128 = vpop.f32.mrf.mxu0
    %v2129 = vadd.f32 %v2056, %v2128
    %v2130 = vpop.f32.mrf.mxu0
    %2131 = vdwg.mxu0
    %v2132 = vadd.f32 %v2129, %v357
    %v2133 = vxor.u32 %v2132, 2147483648
    %v2134 = vmul.f32 %v2133, 1.442695
    %v2135 = vpow.pop %v2134
    %v2136 = vadd.f32 %v2135, 1.0
    %v2137 = vrcp.pop %v2136
    %v2138 = vmul.f32 1.0, %v2137
    %2140 = vrot.lane.b32.xlu0 %v2132, 32
    %v2141 = vpop.permute.xlu0 %2140
    %v2143 = vmul.f32 %v2138, %v2141
    %2145 = vrot.lane.b32.xlu0 %v2143, 64
    %v2146 = vpop.permute.xlu0 %2145
    %v2148 = vadd.f32 %v2132, %v2146
    %v2149 = vtanh.pop %v2148
    %v2150 = vsub.f32 1.0, %v2138
    %2152 = vrot.lane.b32.xlu0 %v2149, 96
    %v2153 = vpop.permute.xlu0 %2152
    %v2155 = vmul.f32 %v2150, %v2153
    %v2156 = vmul.f32 %v2138, %v1904
    %v2157 = vadd.f32 %v2155, %v2156
    %2159 = vrot.lane.b32.xlu0 %v2157, 96
    %v2160 = vpop.permute.xlu0 %2159
    %s2162 = scalar_lea.vmem [#allocation2], 56
    %2163 = vst.msk [vmem:[%s2162] sm:$0xff] %vm206, %v2160
    %v2164 = vld [vmem:[#allocation2] sm:$0xff]
    %v2165 = vld [vmem:[#allocation2 + $0x8] sm:$0xff]
    %v2166 = vld [vmem:[#allocation2 + $0x10] sm:$0xff]
    %v2167 = vld [vmem:[#allocation2 + $0x18] sm:$0xff]
    %v2168 = vld [vmem:[#allocation2 + $0x20] sm:$0xff]
    %v2169 = vld [vmem:[#allocation2 + $0x28] sm:$0xff]
    %v2170 = vld [vmem:[#allocation2 + $0x30] sm:$0xff]
    %v2171 = vld [vmem:[#allocation2 + $0x38] sm:$0xff]
    %v2172 = vld [vmem:[%s7] sm:$0x1]
    %v2174 = vlaneseq
    %v2175 = vshrl.u32 %v2174, 7
    %v2176 = vsub.s32 0, %v2175
    %v2177 = vrot.slane %v2172, %v2176
    %v2179 = vmul.f32 %v2164, %v2177
    %v2180 = vmul.f32 %v2165, %v2177
    %v2181 = vmul.f32 %v2166, %v2177
    %v2182 = vmul.f32 %v2167, %v2177
    %v2183 = vmul.f32 %v2168, %v2177
    %v2184 = vmul.f32 %v2169, %v2177
    %v2185 = vmul.f32 %v2170, %v2177
    %v2186 = vmul.f32 %v2171, %v2177
    %v2187 = vsel %vm206, %v2179, 0.0
    %2188 = vadd.xlane.f32.xlu0 %v2187
    %v2189 = vpop.xlane.xlu0 %2188
    %v2190 = vsel %vm206, %v2180, 0.0
    %2191 = vadd.xlane.f32.xlu0 %v2190
    %v2192 = vpop.xlane.xlu0 %2191
    %v2193 = vsel %vm206, %v2181, 0.0
    %2194 = vadd.xlane.f32.xlu0 %v2193
    %v2195 = vpop.xlane.xlu0 %2194
    %v2196 = vsel %vm206, %v2182, 0.0
    %2197 = vadd.xlane.f32.xlu0 %v2196
    %v2198 = vpop.xlane.xlu0 %2197
    %v2199 = vsel %vm206, %v2183, 0.0
    %2200 = vadd.xlane.f32.xlu0 %v2199
    %v2201 = vpop.xlane.xlu0 %2200
    %v2202 = vsel %vm206, %v2184, 0.0
    %2203 = vadd.xlane.f32.xlu0 %v2202
    %v2204 = vpop.xlane.xlu0 %2203
    %v2205 = vsel %vm206, %v2185, 0.0
    %2206 = vadd.xlane.f32.xlu0 %v2205
    %v2207 = vpop.xlane.xlu0 %2206
    %v2208 = vsel %vm206, %v2186, 0.0
    %2209 = vadd.xlane.f32.xlu0 %v2208
    %v2210 = vpop.xlane.xlu0 %2209
    %v2211 = vld [vmem:[#allocation3] sm:$0x1]
    %v2213 = vlaneseq
    %v2214 = vshrl.u32 %v2213, 7
    %v2215 = vsub.s32 0, %v2214
    %v2216 = vrot.slane %v2211, %v2215
    %2217 = vset.pattern.permute.xlu0 0
    %2218 = vperm.xlu0 %2217, %v2216
    %v2219 = vpop.permute.xlu0 %2218
    %v2221 = vadd.f32 %v2189, %v2219
    %v2222 = vadd.f32 %v2192, %v2219
    %v2223 = vadd.f32 %v2195, %v2219
    %v2224 = vadd.f32 %v2198, %v2219
    %v2225 = vadd.f32 %v2201, %v2219
    %v2226 = vadd.f32 %v2204, %v2219
    %v2227 = vadd.f32 %v2207, %v2219
    %v2228 = vadd.f32 %v2210, %v2219
    %v2237 = vlaneseq
    %v2238 = vand.u32 %v2237, 127
    %v2239 = vlaneseq
    %v2240 = vshrl.u32 %v2239, 7
    %v2241 = vsub.s32 %v2238, %v2240
    %v2242 = vrot.slane %v2221, %v2241
    %v2243 = vlaneseq
    %v2244 = vshrl.u32 %v2243, 7
    %v2245 = vsub.s32 %v2238, %v2244
    %v2246 = vrot.slane %v2222, %v2245
    %v2247 = vlaneseq
    %v2248 = vshrl.u32 %v2247, 7
    %v2249 = vsub.s32 %v2238, %v2248
    %v2250 = vrot.slane %v2223, %v2249
    %v2251 = vlaneseq
    %v2252 = vshrl.u32 %v2251, 7
    %v2253 = vsub.s32 %v2238, %v2252
    %v2254 = vrot.slane %v2224, %v2253
    %v2255 = vlaneseq
    %v2256 = vshrl.u32 %v2255, 7
    %v2257 = vsub.s32 %v2238, %v2256
    %v2258 = vrot.slane %v2225, %v2257
    %v2259 = vlaneseq
    %v2260 = vshrl.u32 %v2259, 7
    %v2261 = vsub.s32 %v2238, %v2260
    %v2262 = vrot.slane %v2226, %v2261
    %v2263 = vlaneseq
    %v2264 = vshrl.u32 %v2263, 7
    %v2265 = vsub.s32 %v2238, %v2264
    %v2266 = vrot.slane %v2227, %v2265
    %v2267 = vlaneseq
    %v2268 = vshrl.u32 %v2267, 7
    %v2269 = vsub.s32 %v2238, %v2268
    %v2270 = vrot.slane %v2228, %v2269
    %vm2271 = vcmask 1041409
    %v2272 = vsel %vm2271, %v2246, %v2242
    %vm2273 = vcmask 1042434
    %v2274 = vsel %vm2273, %v2250, %v2272
    %vm2275 = vcmask 1043459
    %v2276 = vsel %vm2275, %v2254, %v2274
    %vm2277 = vcmask 1044484
    %v2278 = vsel %vm2277, %v2258, %v2276
    %vm2279 = vcmask 1045509
    %v2280 = vsel %vm2279, %v2262, %v2278
    %vm2281 = vcmask 1046534
    %v2282 = vsel %vm2281, %v2266, %v2280
    %vm2283 = vcmask 1047559
    %v2284 = vsel %vm2283, %v2270, %v2282
    %vm2286 = vcmask 64512
    %2287 = vst.msk [vmem:[#allocation13] sm:$0xff] %vm2286, %v2284
    %2288 = vst.msk [vmem:[#allocation14] sm:$0xff] %vm206, %v2160
    // Predicated region
    $region62: #{tpu_custom_call.1} parent=1 // pred_check
      _
    $region63: #{tpu_custom_call.1} parent=1 // pred_check_branch
      %2290 = sbr.rel (0) target = $region65
    $region64: #{tpu_custom_call.1} parent=1 // pred_region
      %s2292 = ssub.s32 128, 128
      %2293 = vsyncadd [#allocation6], %s2292
      %s2295 = sshll.u32 [#allocation13], 4
      %s2296 = int_to_ptr.vmem [resolvable:$true] %s2295
      %2298 = dma.vmem_to_hbm [thread:$0]  %s2296, 128, %s9, [#allocation6]
    $region65: #{tpu_custom_call.1} parent=1 // pred_fallthru
      _
    // Predicated region
    $region66: #{tpu_custom_call.1} parent=1 // pred_check
      _
    $region67: #{tpu_custom_call.1} parent=1 // pred_check_branch
      %2300 = sbr.rel (0) target = $region69
    $region68: #{tpu_custom_call.1} parent=1 // pred_region
      %s2302 = ssub.s32 128, 128
      %2303 = vsyncadd [#allocation15], %s2302
      %s2305 = sshll.u32 [#allocation14], 4
      %s2306 = int_to_ptr.vmem [resolvable:$true] %s2305
      %2308 = dma.vmem_to_hbm [thread:$0]  %s2306, 128, %s10, [#allocation15]
    $region69: #{tpu_custom_call.1} parent=1 // pred_fallthru
      _
    // Predicated region
    $region70: #{tpu_custom_call.1} parent=1 // pred_check
      _
    $region71: #{tpu_custom_call.1} parent=1 // pred_check_branch
      %2310 = sbr.rel (0) target = $region73
    $region72: #{tpu_custom_call.1} parent=1 // pred_region
      %2311 = dma.done [#allocation6], 128
    $region73: #{tpu_custom_call.1} parent=1 // pred_fallthru
      _
    // Predicated region
    $region74: #{tpu_custom_call.1} parent=1 // pred_check
      _
    $region75: #{tpu_custom_call.1} parent=1 // pred_check_branch
      %2313 = sbr.rel (0) target = $region77
    $region76: #{tpu_custom_call.1} parent=1 // pred_region
      %2314 = dma.done [#allocation15], 128
    $region77: #{tpu_custom_call.1} parent=1 // pred_fallthru
      _
    %2315 = vsyncpa [#allocation5], 1
    %2316 = vsyncpa [#allocation8], 1
    %2317 = vsyncpa [#allocation11], 1
    %2318 = vsyncpa [#allocation6], 1
    %2319 = vsyncpa [#allocation15], 1

</llo_original>
